<compile_context>
chip_gen: v6e
topology: v6e:2x2x1
jax: 0.10.0
libtpu: 0.0.40
codegen_flags: <defaults>
</compile_context>

<pallas_src>
import jax
import jax.numpy as jnp
from jax import lax
from jax.experimental import pallas as pl
from jax.experimental.pallas import tpu as pltpu

# ---- model dims (synthetic, small) -----------------------------------------
BATCH = 2
SEQ = 8
HIDDEN = 32
NUM_HEADS = 2
HEAD_DIM = HIDDEN // NUM_HEADS
INTERMEDIATE = 64
NUM_LAYERS = 2
LN_EPS = 1e-5

# ---- packed-slab layout constants -------------------------------------------
# weight slab: (L, W_ROWS, W_COLS) bf16
QKV_OFF = 0                       # cols [0, 3H)        rows [0, H)   : wqkv^T
WO_OFF = 3 * HIDDEN               # cols [3H, 4H)       rows [0, H)   : wo^T
FC1_OFF = 4 * HIDDEN              # cols [4H, 4H+I)     rows [0, H)   : fc1^T
W_COLS = 4 * HIDDEN + INTERMEDIATE
W_ROWS = HIDDEN + INTERMEDIATE    # fc2^T lives at rows [H, H+I), cols [0, H)
# bias/LN slab: (L, 8, 3H) f32, one vector per row
R_LN1_W, R_LN1_B, R_BQKV, R_BO, R_LN2_W, R_LN2_B, R_FC1_B, R_FC2_B = range(8)


def quick_gelu(x):
    # CLIP's activation: x * sigmoid(1.702 * x)  (f32 on the VPU/EUP)
    return x * jax.nn.sigmoid(1.702 * x)


# ---- Pallas kernel: full encoder stack, whole batch in one grid step ---------
def encoder_kernel(x_ref, bias_ref, w_ref, b_ref, out_ref, attn_sc):
    f32 = jnp.float32
    bf16 = jnp.bfloat16

    h = x_ref[...]                                    # (B*S, H) f32 residual stream

    for l in range(NUM_LAYERS):                       # static unroll over layers
        # ---- packed weight / bias views for this layer (pre-transposed host-side)
        wqkv = w_ref[l, 0:HIDDEN, QKV_OFF:QKV_OFF + 3 * HIDDEN]          # (H, 3H) bf16
        wo = w_ref[l, 0:HIDDEN, WO_OFF:WO_OFF + HIDDEN]                  # (H, H)
        fc1w = w_ref[l, 0:HIDDEN, FC1_OFF:FC1_OFF + INTERMEDIATE]        # (H, I)
        fc2w = w_ref[l, HIDDEN:HIDDEN + INTERMEDIATE, 0:HIDDEN]          # (I, H)

        ln1_w = b_ref[l, R_LN1_W:R_LN1_W + 1, 0:HIDDEN]                  # (1, H) f32
        ln1_b = b_ref[l, R_LN1_B:R_LN1_B + 1, 0:HIDDEN]
        bqkv = b_ref[l, R_BQKV:R_BQKV + 1, 0:3 * HIDDEN]                 # (1, 3H)
        bo = b_ref[l, R_BO:R_BO + 1, 0:HIDDEN]
        ln2_w = b_ref[l, R_LN2_W:R_LN2_W + 1, 0:HIDDEN]
        ln2_b = b_ref[l, R_LN2_B:R_LN2_B + 1, 0:HIDDEN]
        fc1_b = b_ref[l, R_FC1_B:R_FC1_B + 1, 0:INTERMEDIATE]            # (1, I)
        fc2_b = b_ref[l, R_FC2_B:R_FC2_B + 1, 0:HIDDEN]

        # ---- LayerNorm 1 (f32 elementwise) ----
        residual = h
        mu = jnp.mean(h, axis=-1, keepdims=True)
        var = jnp.mean((h - mu) ** 2, axis=-1, keepdims=True)
        hn = (h - mu) * lax.rsqrt(var + LN_EPS) * ln1_w + ln1_b

        # ---- fused Q/K/V projection (bf16 operands, f32 accumulate; q pre-scaled)
        qkv = jnp.dot(hn.astype(bf16), wqkv,
                      preferred_element_type=f32) + bqkv                 # (B*S, 3H) f32
        qkv16 = qkv.astype(bf16)                                         # one cast for MXU reuse

        # ---- attention: static unroll over (batch, head); results go straight
        #      into the bf16 VMEM scratch (no concatenate assembly) ----
        for i in range(BATCH):
            r0 = i * SEQ
            bias_i = bias_ref[i]                                         # (1, S) additive bias
            for hd in range(NUM_HEADS):
                c0 = hd * HEAD_DIM
                qh = qkv16[r0:r0 + SEQ, c0:c0 + HEAD_DIM]                # (S, Dh) bf16
                kh = qkv16[r0:r0 + SEQ, HIDDEN + c0:HIDDEN + c0 + HEAD_DIM]
                vh = qkv16[r0:r0 + SEQ, 2 * HIDDEN + c0:2 * HIDDEN + c0 + HEAD_DIM]
                # scores: (S, S) = qh @ kh^T  (f32 accumulate)
                s = lax.dot_general(qh, kh, (((1,), (1,)), ((), ())),
                                    preferred_element_type=f32)
                s = s + bias_i                                           # implicit (1,S) broadcast
                m = jnp.max(s, axis=-1, keepdims=True)
                p = jnp.exp(s - m)
                p = p / jnp.sum(p, axis=-1, keepdims=True)               # exact softmax denom
                ho = jnp.dot(p.astype(bf16), vh, preferred_element_type=f32)
                attn_sc[r0:r0 + SEQ, c0:c0 + HEAD_DIM] = ho.astype(bf16)

        attn = jnp.dot(attn_sc[...], wo, preferred_element_type=f32) + bo
        h = residual + attn

        # ---- LayerNorm 2 + MLP (quick_gelu) ----
        residual = h
        mu = jnp.mean(h, axis=-1, keepdims=True)
        var = jnp.mean((h - mu) ** 2, axis=-1, keepdims=True)
        hn = (h - mu) * lax.rsqrt(var + LN_EPS) * ln2_w + ln2_b

        mid = jnp.dot(hn.astype(bf16), fc1w, preferred_element_type=f32) + fc1_b
        mid = quick_gelu(mid)                                            # f32
        mlp = jnp.dot(mid.astype(bf16), fc2w, preferred_element_type=f32) + fc2_b
        h = residual + mlp

    out_ref[...] = h


# ---- wrapper ----------------------------------------------------------------
def self_model_forward(hidden_states, attention_mask, params):
    B, S, H = hidden_states.shape
    L, I = NUM_LAYERS, INTERMEDIATE
    scale = HEAD_DIM ** -0.5

    # ---- host-side parameter packing (zero runtime cost) ----
    # fused qkv weight (q pre-scaled), transposed to (H_in, H_out) layout
    wqkv_t = jnp.transpose(
        jnp.concatenate([params['wq'] * scale, params['wk'], params['wv']], axis=1),
        (0, 2, 1))                                                       # (L, H, 3H)
    wslab = jnp.zeros((L, W_ROWS, W_COLS), jnp.float32)
    wslab = wslab.at[:, 0:H, QKV_OFF:QKV_OFF + 3 * H].set(wqkv_t)
    wslab = wslab.at[:, 0:H, WO_OFF:WO_OFF + H].set(jnp.transpose(params['wo'], (0, 2, 1)))
    wslab = wslab.at[:, 0:H, FC1_OFF:FC1_OFF + I].set(jnp.transpose(params['fc1_w'], (0, 2, 1)))
    wslab = wslab.at[:, H:H + I, 0:H].set(jnp.transpose(params['fc2_w'], (0, 2, 1)))
    wslab = wslab.astype(jnp.bfloat16)                                   # bf16 MXU operands

    bslab = jnp.zeros((L, 8, 3 * H), jnp.float32)
    bslab = bslab.at[:, R_LN1_W, 0:H].set(params['ln1_w'])
    bslab = bslab.at[:, R_LN1_B, 0:H].set(params['ln1_b'])
    bslab = bslab.at[:, R_BQKV, :].set(
        jnp.concatenate([params['bq'] * scale, params['bk'], params['bv']], axis=1))
    bslab = bslab.at[:, R_BO, 0:H].set(params['bo'])
    bslab = bslab.at[:, R_LN2_W, 0:H].set(params['ln2_w'])
    bslab = bslab.at[:, R_LN2_B, 0:H].set(params['ln2_b'])
    bslab = bslab.at[:, R_FC1_B, 0:I].set(params['fc1_b'])
    bslab = bslab.at[:, R_FC2_B, 0:H].set(params['fc2_b'])

    # prepare_4d_attention_mask: (1 - mask) * finfo(dtype).min, additive on keys
    bias = (1.0 - attention_mask.astype(jnp.float32)) * jnp.finfo(jnp.float32).min
    bias = bias.reshape(B, 1, S)

    # activations as a (B*S, H) slab (wrapper-side reshape, not in-kernel)
    x2d = hidden_states.reshape(B * S, H).astype(jnp.float32)

    # single grid step: whole batch folded (per-element compute << step overhead)
    in_specs = [
        pl.BlockSpec((B * S, H), lambda g: (0, 0)),          # activations
        pl.BlockSpec((B, 1, S), lambda g: (0, 0, 0)),        # additive attention bias
        pl.BlockSpec(wslab.shape, lambda g: (0, 0, 0)),      # packed weights (bf16)
        pl.BlockSpec(bslab.shape, lambda g: (0, 0, 0)),      # packed biases / LN (f32)
    ]
    out_specs = pl.BlockSpec((B * S, H), lambda g: (0, 0))
    out_shape = jax.ShapeDtypeStruct((B * S, H), jnp.float32)

    last2d = pl.pallas_call(
        encoder_kernel,
        grid=(1,),
        in_specs=in_specs,
        out_specs=out_specs,
        out_shape=out_shape,
        scratch_shapes=[pltpu.VMEM((B * S, H), jnp.bfloat16)],   # per-head attn assembly
        compiler_params=pltpu.CompilerParams(
            dimension_semantics=("arbitrary",)),
    )(x2d, bias, wslab, bslab)

    last_hidden = last2d.reshape(B, S, H)
    # pooled_output = last_hidden_state[:, 0, :]  (free slice in the wrapper)
    return dict(last_hidden_state=last_hidden,
                pooler_output=last_hidden[:, 0, :])


# ---- pure-JAX reference (for correctness check) -----------------------------
def ref_forward(hidden_states, attention_mask, params):
    B, S, H = hidden_states.shape
    bias = (1.0 - attention_mask.astype(jnp.float32)) * jnp.finfo(jnp.float32).min
    h = hidden_states
    scale = HEAD_DIM ** -0.5
    for l in range(NUM_LAYERS):
        residual = h
        mu = jnp.mean(h, -1, keepdims=True)
        var = jnp.mean((h - mu) ** 2, -1, keepdims=True)
        hn = (h - mu) * lax.rsqrt(var + LN_EPS) * params['ln1_w'][l] + params['ln1_b'][l]
        q = (hn @ params['wq'][l].T + params['bq'][l]) * scale
        k = hn @ params['wk'][l].T + params['bk'][l]
        v = hn @ params['wv'][l].T + params['bv'][l]
        q = q.reshape(B, S, NUM_HEADS, HEAD_DIM)
        k = k.reshape(B, S, NUM_HEADS, HEAD_DIM)
        v = v.reshape(B, S, NUM_HEADS, HEAD_DIM)
        scores = jnp.einsum('bqhd,bkhd->bhqk', q, k) + bias[:, None, None, :]
        p = jax.nn.softmax(scores, axis=-1)
        attn = jnp.einsum('bhqk,bkhd->bqhd', p, v).reshape(B, S, H)
        attn = attn @ params['wo'][l].T + params['bo'][l]
        h = residual + attn
        residual = h
        mu = jnp.mean(h, -1, keepdims=True)
        var = jnp.mean((h - mu) ** 2, -1, keepdims=True)
        hn = (h - mu) * lax.rsqrt(var + LN_EPS) * params['ln2_w'][l] + params['ln2_b'][l]
        mid = quick_gelu(hn @ params['fc1_w'][l].T + params['fc1_b'][l])
        h = residual + (mid @ params['fc2_w'][l].T + params['fc2_b'][l])
    return dict(last_hidden_state=h, pooler_output=h[:, 0, :])


# ---- deterministic parameter init -------------------------------------------
def init_params(key):
    ks = jax.random.split(key, 6)
    L, H, I = NUM_LAYERS, HIDDEN, INTERMEDIATE
    std = 0.02
    return dict(
        ln1_w=jnp.ones((L, H), jnp.float32),
        ln1_b=jnp.zeros((L, H), jnp.float32),
        wq=jax.random.normal(ks[0], (L, H, H), jnp.float32) * std,
        bq=jnp.zeros((L, H), jnp.float32),
        wk=jax.random.normal(ks[1], (L, H, H), jnp.float32) * std,
        bk=jnp.zeros((L, H), jnp.float32),
        wv=jax.random.normal(ks[2], (L, H, H), jnp.float32) * std,
        bv=jnp.zeros((L, H), jnp.float32),
        wo=jax.random.normal(ks[3], (L, H, H), jnp.float32) * std,
        bo=jnp.zeros((L, H), jnp.float32),
        ln2_w=jnp.ones((L, H), jnp.float32),
        ln2_b=jnp.zeros((L, H), jnp.float32),
        fc1_w=jax.random.normal(ks[4], (L, I, H), jnp.float32) * std,
        fc1_b=jnp.zeros((L, I), jnp.float32),
        fc2_w=jax.random.normal(ks[5], (L, H, I), jnp.float32) * std,
        fc2_b=jnp.zeros((L, H), jnp.float32),
    )


if __name__ == "__main__":
    key = jax.random.PRNGKey(0)
    k_x, k_p = jax.random.split(key)
    hidden_states = jax.random.normal(k_x, (BATCH, SEQ, HIDDEN), jnp.float32)
    # mask out the last two tokens of the second batch element
    attention_mask = jnp.array(
        [[1] * SEQ, [1] * (SEQ - 2) + [0] * 2], dtype=jnp.float32)
    params = init_params(k_p)

    out = self_model_forward(hidden_states, attention_mask, params)
    jax.block_until_ready(out)

    ref = ref_forward(hidden_states, attention_mask, params)
    # tolerance reflects bf16 MXU operands (f32 accumulate); elementwise math is f32
    assert jnp.allclose(out['last_hidden_state'], ref['last_hidden_state'],
                        rtol=2e-2, atol=2e-2)
    assert jnp.allclose(out['pooler_output'], ref['pooler_output'],
                        rtol=2e-2, atol=2e-2)
    print("KERNEL_OK")
</pallas_src>

<mosaic_0001>
module attributes {stable_mosaic.version = 11 : i64} {
  func.func @encoder_kernel(%arg0: i32, %arg1: memref<16x32xf32, #tpu.memory_space<vmem>>, %arg2: memref<2x1x8xf32, #tpu.memory_space<vmem>>, %arg3: memref<2x96x192xbf16, #tpu.memory_space<vmem>>, %arg4: memref<2x8x96xf32, #tpu.memory_space<vmem>>, %arg5: memref<16x32xf32, #tpu.memory_space<vmem>>, %arg6: memref<16x32xbf16, #tpu.memory_space<vmem>>) attributes {dimension_semantics = [#tpu.dimension_semantics<arbitrary>], iteration_bounds = array<i64: 1>, scalar_prefetch = 0 : i64, scratch_operands = 1 : i64, tpu.core_type = #tpu.core_type<tc>, window_params = [{pipeline_mode = #tpu.pipeline_mode<synchronous>, transform_indices = @transform_0, window_bounds = array<i64: 16, 32>}, {pipeline_mode = #tpu.pipeline_mode<synchronous>, transform_indices = @transform_1, window_bounds = array<i64: 2, 1, 8>}, {pipeline_mode = #tpu.pipeline_mode<synchronous>, transform_indices = @transform_2, window_bounds = array<i64: 2, 96, 192>}, {pipeline_mode = #tpu.pipeline_mode<synchronous>, transform_indices = @transform_3, window_bounds = array<i64: 2, 8, 96>}, {pipeline_mode = #tpu.pipeline_mode<synchronous>, transform_indices = @transform_4, window_bounds = array<i64: 16, 32>}]} {
    %c0 = arith.constant 0 : index
    %c0_0 = arith.constant 0 : index
    %0 = vector.load %arg1[%c0, %c0_0] : memref<16x32xf32, #tpu.memory_space<vmem>>, vector<16x32xf32>
    %c0_1 = arith.constant 0 : index
    %c0_2 = arith.constant 0 : index
    %c0_3 = arith.constant 0 : index
    %1 = vector.load %arg3[%c0_1, %c0_2, %c0_3] : memref<2x96x192xbf16, #tpu.memory_space<vmem>>, vector<1x32x96xbf16>
    %2 = vector.shape_cast %1 : vector<1x32x96xbf16> to vector<32x96xbf16>
    %c0_4 = arith.constant 0 : index
    %c0_5 = arith.constant 0 : index
    %c96 = arith.constant 96 : index
    %3 = vector.load %arg3[%c0_4, %c0_5, %c96] : memref<2x96x192xbf16, #tpu.memory_space<vmem>>, vector<1x32x32xbf16>
    %4 = vector.shape_cast %3 : vector<1x32x32xbf16> to vector<32x32xbf16>
    %c0_6 = arith.constant 0 : index
    %c0_7 = arith.constant 0 : index
    %c128 = arith.constant 128 : index
    %5 = vector.load %arg3[%c0_6, %c0_7, %c128] : memref<2x96x192xbf16, #tpu.memory_space<vmem>>, vector<1x32x64xbf16>
    %6 = vector.shape_cast %5 : vector<1x32x64xbf16> to vector<32x64xbf16>
    %c0_8 = arith.constant 0 : index
    %c32 = arith.constant 32 : index
    %c0_9 = arith.constant 0 : index
    %7 = vector.load %arg3[%c0_8, %c32, %c0_9] : memref<2x96x192xbf16, #tpu.memory_space<vmem>>, vector<1x64x32xbf16>
    %8 = vector.shape_cast %7 : vector<1x64x32xbf16> to vector<64x32xbf16>
    %c0_10 = arith.constant 0 : index
    %c0_11 = arith.constant 0 : index
    %c0_12 = arith.constant 0 : index
    %9 = vector.load %arg4[%c0_10, %c0_11, %c0_12] : memref<2x8x96xf32, #tpu.memory_space<vmem>>, vector<1x1x32xf32>
    %10 = vector.shape_cast %9 : vector<1x1x32xf32> to vector<1x32xf32>
    %c0_13 = arith.constant 0 : index
    %c1 = arith.constant 1 : index
    %c0_14 = arith.constant 0 : index
    %11 = vector.load %arg4[%c0_13, %c1, %c0_14] : memref<2x8x96xf32, #tpu.memory_space<vmem>>, vector<1x1x32xf32>
    %12 = vector.shape_cast %11 : vector<1x1x32xf32> to vector<1x32xf32>
    %c0_15 = arith.constant 0 : index
    %c2 = arith.constant 2 : index
    %c0_16 = arith.constant 0 : index
    %13 = vector.load %arg4[%c0_15, %c2, %c0_16] : memref<2x8x96xf32, #tpu.memory_space<vmem>>, vector<1x1x96xf32>
    %14 = vector.shape_cast %13 : vector<1x1x96xf32> to vector<1x96xf32>
    %c0_17 = arith.constant 0 : index
    %c3 = arith.constant 3 : index
    %c0_18 = arith.constant 0 : index
    %15 = vector.load %arg4[%c0_17, %c3, %c0_18] : memref<2x8x96xf32, #tpu.memory_space<vmem>>, vector<1x1x32xf32>
    %16 = vector.shape_cast %15 : vector<1x1x32xf32> to vector<1x32xf32>
    %c0_19 = arith.constant 0 : index
    %c4 = arith.constant 4 : index
    %c0_20 = arith.constant 0 : index
    %17 = vector.load %arg4[%c0_19, %c4, %c0_20] : memref<2x8x96xf32, #tpu.memory_space<vmem>>, vector<1x1x32xf32>
    %18 = vector.shape_cast %17 : vector<1x1x32xf32> to vector<1x32xf32>
    %c0_21 = arith.constant 0 : index
    %c5 = arith.constant 5 : index
    %c0_22 = arith.constant 0 : index
    %19 = vector.load %arg4[%c0_21, %c5, %c0_22] : memref<2x8x96xf32, #tpu.memory_space<vmem>>, vector<1x1x32xf32>
    %20 = vector.shape_cast %19 : vector<1x1x32xf32> to vector<1x32xf32>
    %c0_23 = arith.constant 0 : index
    %c6 = arith.constant 6 : index
    %c0_24 = arith.constant 0 : index
    %21 = vector.load %arg4[%c0_23, %c6, %c0_24] : memref<2x8x96xf32, #tpu.memory_space<vmem>>, vector<1x1x64xf32>
    %22 = vector.shape_cast %21 : vector<1x1x64xf32> to vector<1x64xf32>
    %c0_25 = arith.constant 0 : index
    %c7 = arith.constant 7 : index
    %c0_26 = arith.constant 0 : index
    %23 = vector.load %arg4[%c0_25, %c7, %c0_26] : memref<2x8x96xf32, #tpu.memory_space<vmem>>, vector<1x1x32xf32>
    %24 = vector.shape_cast %23 : vector<1x1x32xf32> to vector<1x32xf32>
    %cst = arith.constant dense<0.000000e+00> : vector<16xf32>
    %25 = vector.multi_reduction <add>, %0, %cst [1] : vector<16x32xf32> to vector<16xf32>
    %26 = vector.shape_cast %25 : vector<16xf32> to vector<16x1xf32>
    %cst_27 = arith.constant 3.200000e+01 : f32
    %27 = vector.broadcast %cst_27 : f32 to vector<16x1xf32>
    %28 = arith.divf %26, %27 : vector<16x1xf32>
    %29 = vector.broadcast %28 : vector<16x1xf32> to vector<16x32xf32>
    %30 = arith.subf %0, %29 : vector<16x32xf32>
    %31 = arith.mulf %30, %30 : vector<16x32xf32>
    %cst_28 = arith.constant dense<0.000000e+00> : vector<16xf32>
    %32 = vector.multi_reduction <add>, %31, %cst_28 [1] : vector<16x32xf32> to vector<16xf32>
    %33 = vector.shape_cast %32 : vector<16xf32> to vector<16x1xf32>
    %cst_29 = arith.constant 3.200000e+01 : f32
    %34 = vector.broadcast %cst_29 : f32 to vector<16x1xf32>
    %35 = arith.divf %33, %34 : vector<16x1xf32>
    %36 = vector.broadcast %28 : vector<16x1xf32> to vector<16x32xf32>
    %37 = arith.subf %0, %36 : vector<16x32xf32>
    %cst_30 = arith.constant 9.99999974E-6 : f32
    %38 = vector.broadcast %cst_30 : f32 to vector<16x1xf32>
    %39 = arith.addf %35, %38 : vector<16x1xf32>
    %40 = math.rsqrt %39 : vector<16x1xf32>
    %41 = vector.broadcast %40 : vector<16x1xf32> to vector<16x32xf32>
    %42 = arith.mulf %37, %41 : vector<16x32xf32>
    %43 = vector.broadcast %10 : vector<1x32xf32> to vector<16x32xf32>
    %44 = arith.mulf %42, %43 : vector<16x32xf32>
    %45 = vector.broadcast %12 : vector<1x32xf32> to vector<16x32xf32>
    %46 = arith.addf %44, %45 : vector<16x32xf32>
    %47 = arith.truncf %46 : vector<16x32xf32> to vector<16x32xbf16>
    %cst_31 = arith.constant dense<0.000000e+00> : vector<16x96xf32>
    %48 = tpu.matmul %47, %2, %cst_31 {dimension_numbers = #tpu.dot_dimension_numbers<[1], [0], [0], [1], [0, 0, 1, 1], [], []>} : vector<16x32xbf16>, vector<32x96xbf16>, vector<16x96xf32> -> vector<16x96xf32>
    %49 = vector.broadcast %14 : vector<1x96xf32> to vector<16x96xf32>
    %50 = arith.addf %48, %49 : vector<16x96xf32>
    %51 = arith.truncf %50 : vector<16x96xf32> to vector<16x96xbf16>
    %c0_32 = arith.constant 0 : index
    %c0_33 = arith.constant 0 : index
    %c0_34 = arith.constant 0 : index
    %52 = vector.load %arg2[%c0_32, %c0_33, %c0_34] : memref<2x1x8xf32, #tpu.memory_space<vmem>>, vector<1x1x8xf32>
    %53 = vector.shape_cast %52 : vector<1x1x8xf32> to vector<1x8xf32>
    %54 = vector.extract_strided_slice %51 {offsets = [0, 0], sizes = [8, 16], strides = [1, 1]} : vector<16x96xbf16> to vector<8x16xbf16>
    %55 = vector.extract_strided_slice %51 {offsets = [0, 32], sizes = [8, 16], strides = [1, 1]} : vector<16x96xbf16> to vector<8x16xbf16>
    %56 = vector.extract_strided_slice %51 {offsets = [0, 64], sizes = [8, 16], strides = [1, 1]} : vector<16x96xbf16> to vector<8x16xbf16>
    %cst_35 = arith.constant dense<0.000000e+00> : vector<8x8xf32>
    %57 = tpu.matmul %54, %55, %cst_35 {dimension_numbers = #tpu.dot_dimension_numbers<[1], [1], [0], [0], [0, 0, 1, 0], [], []>} : vector<8x16xbf16>, vector<8x16xbf16>, vector<8x8xf32> -> vector<8x8xf32>
    %58 = vector.broadcast %53 : vector<1x8xf32> to vector<8x8xf32>
    %59 = arith.addf %57, %58 : vector<8x8xf32>
    %cst_36 = arith.constant dense<0xFF800000> : vector<8xf32>
    %60 = vector.multi_reduction <maximumf>, %59, %cst_36 [1] : vector<8x8xf32> to vector<8xf32>
    %61 = vector.shape_cast %60 : vector<8xf32> to vector<8x1xf32>
    %62 = vector.broadcast %61 : vector<8x1xf32> to vector<8x8xf32>
    %63 = arith.subf %59, %62 : vector<8x8xf32>
    %64 = math.exp %63 : vector<8x8xf32>
    %cst_37 = arith.constant dense<0.000000e+00> : vector<8xf32>
    %65 = vector.multi_reduction <add>, %64, %cst_37 [1] : vector<8x8xf32> to vector<8xf32>
    %66 = vector.shape_cast %65 : vector<8xf32> to vector<8x1xf32>
    %67 = vector.broadcast %66 : vector<8x1xf32> to vector<8x8xf32>
    %68 = arith.divf %64, %67 : vector<8x8xf32>
    %69 = arith.truncf %68 : vector<8x8xf32> to vector<8x8xbf16>
    %cst_38 = arith.constant dense<0.000000e+00> : vector<8x16xf32>
    %70 = tpu.matmul %69, %56, %cst_38 {dimension_numbers = #tpu.dot_dimension_numbers<[1], [0], [0], [1], [0, 0, 1, 1], [], []>} : vector<8x8xbf16>, vector<8x16xbf16>, vector<8x16xf32> -> vector<8x16xf32>
    %71 = arith.truncf %70 : vector<8x16xf32> to vector<8x16xbf16>
    %c0_39 = arith.constant 0 : index
    %c0_40 = arith.constant 0 : index
    %72 = vector.load %arg6[%c0_39, %c0_40] : memref<16x32xbf16, #tpu.memory_space<vmem>>, vector<8x16xbf16>
    tpu.vector_store %arg6[%c0_39, %c0_40], %71 {strides = array<i32>} : memref<16x32xbf16, #tpu.memory_space<vmem>>, vector<8x16xbf16>,
    %73 = vector.extract_strided_slice %51 {offsets = [0, 16], sizes = [8, 16], strides = [1, 1]} : vector<16x96xbf16> to vector<8x16xbf16>
    %74 = vector.extract_strided_slice %51 {offsets = [0, 48], sizes = [8, 16], strides = [1, 1]} : vector<16x96xbf16> to vector<8x16xbf16>
    %75 = vector.extract_strided_slice %51 {offsets = [0, 80], sizes = [8, 16], strides = [1, 1]} : vector<16x96xbf16> to vector<8x16xbf16>
    %cst_41 = arith.constant dense<0.000000e+00> : vector<8x8xf32>
    %76 = tpu.matmul %73, %74, %cst_41 {dimension_numbers = #tpu.dot_dimension_numbers<[1], [1], [0], [0], [0, 0, 1, 0], [], []>} : vector<8x16xbf16>, vector<8x16xbf16>, vector<8x8xf32> -> vector<8x8xf32>
    %77 = vector.broadcast %53 : vector<1x8xf32> to vector<8x8xf32>
    %78 = arith.addf %76, %77 : vector<8x8xf32>
    %cst_42 = arith.constant dense<0xFF800000> : vector<8xf32>
    %79 = vector.multi_reduction <maximumf>, %78, %cst_42 [1] : vector<8x8xf32> to vector<8xf32>
    %80 = vector.shape_cast %79 : vector<8xf32> to vector<8x1xf32>
    %81 = vector.broadcast %80 : vector<8x1xf32> to vector<8x8xf32>
    %82 = arith.subf %78, %81 : vector<8x8xf32>
    %83 = math.exp %82 : vector<8x8xf32>
    %cst_43 = arith.constant dense<0.000000e+00> : vector<8xf32>
    %84 = vector.multi_reduction <add>, %83, %cst_43 [1] : vector<8x8xf32> to vector<8xf32>
    %85 = vector.shape_cast %84 : vector<8xf32> to vector<8x1xf32>
    %86 = vector.broadcast %85 : vector<8x1xf32> to vector<8x8xf32>
    %87 = arith.divf %83, %86 : vector<8x8xf32>
    %88 = arith.truncf %87 : vector<8x8xf32> to vector<8x8xbf16>
    %cst_44 = arith.constant dense<0.000000e+00> : vector<8x16xf32>
    %89 = tpu.matmul %88, %75, %cst_44 {dimension_numbers = #tpu.dot_dimension_numbers<[1], [0], [0], [1], [0, 0, 1, 1], [], []>} : vector<8x8xbf16>, vector<8x16xbf16>, vector<8x16xf32> -> vector<8x16xf32>
    %90 = arith.truncf %89 : vector<8x16xf32> to vector<8x16xbf16>
    %c0_45 = arith.constant 0 : index
    %c16 = arith.constant 16 : index
    %91 = vector.load %arg6[%c0_45, %c16] : memref<16x32xbf16, #tpu.memory_space<vmem>>, vector<8x16xbf16>
    tpu.vector_store %arg6[%c0_45, %c16], %90 {strides = array<i32>} : memref<16x32xbf16, #tpu.memory_space<vmem>>, vector<8x16xbf16>,
    %c1_46 = arith.constant 1 : index
    %c0_47 = arith.constant 0 : index
    %c0_48 = arith.constant 0 : index
    %92 = vector.load %arg2[%c1_46, %c0_47, %c0_48] : memref<2x1x8xf32, #tpu.memory_space<vmem>>, vector<1x1x8xf32>
    %93 = vector.shape_cast %92 : vector<1x1x8xf32> to vector<1x8xf32>
    %94 = vector.extract_strided_slice %51 {offsets = [8, 0], sizes = [8, 16], strides = [1, 1]} : vector<16x96xbf16> to vector<8x16xbf16>
    %95 = vector.extract_strided_slice %51 {offsets = [8, 32], sizes = [8, 16], strides = [1, 1]} : vector<16x96xbf16> to vector<8x16xbf16>
    %96 = vector.extract_strided_slice %51 {offsets = [8, 64], sizes = [8, 16], strides = [1, 1]} : vector<16x96xbf16> to vector<8x16xbf16>
    %cst_49 = arith.constant dense<0.000000e+00> : vector<8x8xf32>
    %97 = tpu.matmul %94, %95, %cst_49 {dimension_numbers = #tpu.dot_dimension_numbers<[1], [1], [0], [0], [0, 0, 1, 0], [], []>} : vector<8x16xbf16>, vector<8x16xbf16>, vector<8x8xf32> -> vector<8x8xf32>
    %98 = vector.broadcast %93 : vector<1x8xf32> to vector<8x8xf32>
    %99 = arith.addf %97, %98 : vector<8x8xf32>
    %cst_50 = arith.constant dense<0xFF800000> : vector<8xf32>
    %100 = vector.multi_reduction <maximumf>, %99, %cst_50 [1] : vector<8x8xf32> to vector<8xf32>
    %101 = vector.shape_cast %100 : vector<8xf32> to vector<8x1xf32>
    %102 = vector.broadcast %101 : vector<8x1xf32> to vector<8x8xf32>
    %103 = arith.subf %99, %102 : vector<8x8xf32>
    %104 = math.exp %103 : vector<8x8xf32>
    %cst_51 = arith.constant dense<0.000000e+00> : vector<8xf32>
    %105 = vector.multi_reduction <add>, %104, %cst_51 [1] : vector<8x8xf32> to vector<8xf32>
    %106 = vector.shape_cast %105 : vector<8xf32> to vector<8x1xf32>
    %107 = vector.broadcast %106 : vector<8x1xf32> to vector<8x8xf32>
    %108 = arith.divf %104, %107 : vector<8x8xf32>
    %109 = arith.truncf %108 : vector<8x8xf32> to vector<8x8xbf16>
    %cst_52 = arith.constant dense<0.000000e+00> : vector<8x16xf32>
    %110 = tpu.matmul %109, %96, %cst_52 {dimension_numbers = #tpu.dot_dimension_numbers<[1], [0], [0], [1], [0, 0, 1, 1], [], []>} : vector<8x8xbf16>, vector<8x16xbf16>, vector<8x16xf32> -> vector<8x16xf32>
    %111 = arith.truncf %110 : vector<8x16xf32> to vector<8x16xbf16>
    %c8 = arith.constant 8 : index
    %c0_53 = arith.constant 0 : index
    %112 = vector.load %arg6[%c8, %c0_53] : memref<16x32xbf16, #tpu.memory_space<vmem>>, vector<8x16xbf16>
    tpu.vector_store %arg6[%c8, %c0_53], %111 {strides = array<i32>} : memref<16x32xbf16, #tpu.memory_space<vmem>>, vector<8x16xbf16>,
    %113 = vector.extract_strided_slice %51 {offsets = [8, 16], sizes = [8, 16], strides = [1, 1]} : vector<16x96xbf16> to vector<8x16xbf16>
    %114 = vector.extract_strided_slice %51 {offsets = [8, 48], sizes = [8, 16], strides = [1, 1]} : vector<16x96xbf16> to vector<8x16xbf16>
    %115 = vector.extract_strided_slice %51 {offsets = [8, 80], sizes = [8, 16], strides = [1, 1]} : vector<16x96xbf16> to vector<8x16xbf16>
    %cst_54 = arith.constant dense<0.000000e+00> : vector<8x8xf32>
    %116 = tpu.matmul %113, %114, %cst_54 {dimension_numbers = #tpu.dot_dimension_numbers<[1], [1], [0], [0], [0, 0, 1, 0], [], []>} : vector<8x16xbf16>, vector<8x16xbf16>, vector<8x8xf32> -> vector<8x8xf32>
    %117 = vector.broadcast %93 : vector<1x8xf32> to vector<8x8xf32>
    %118 = arith.addf %116, %117 : vector<8x8xf32>
    %cst_55 = arith.constant dense<0xFF800000> : vector<8xf32>
    %119 = vector.multi_reduction <maximumf>, %118, %cst_55 [1] : vector<8x8xf32> to vector<8xf32>
    %120 = vector.shape_cast %119 : vector<8xf32> to vector<8x1xf32>
    %121 = vector.broadcast %120 : vector<8x1xf32> to vector<8x8xf32>
    %122 = arith.subf %118, %121 : vector<8x8xf32>
    %123 = math.exp %122 : vector<8x8xf32>
    %cst_56 = arith.constant dense<0.000000e+00> : vector<8xf32>
    %124 = vector.multi_reduction <add>, %123, %cst_56 [1] : vector<8x8xf32> to vector<8xf32>
    %125 = vector.shape_cast %124 : vector<8xf32> to vector<8x1xf32>
    %126 = vector.broadcast %125 : vector<8x1xf32> to vector<8x8xf32>
    %127 = arith.divf %123, %126 : vector<8x8xf32>
    %128 = arith.truncf %127 : vector<8x8xf32> to vector<8x8xbf16>
    %cst_57 = arith.constant dense<0.000000e+00> : vector<8x16xf32>
    %129 = tpu.matmul %128, %115, %cst_57 {dimension_numbers = #tpu.dot_dimension_numbers<[1], [0], [0], [1], [0, 0, 1, 1], [], []>} : vector<8x8xbf16>, vector<8x16xbf16>, vector<8x16xf32> -> vector<8x16xf32>
    %130 = arith.truncf %129 : vector<8x16xf32> to vector<8x16xbf16>
    %c8_58 = arith.constant 8 : index
    %c16_59 = arith.constant 16 : index
    %131 = vector.load %arg6[%c8_58, %c16_59] : memref<16x32xbf16, #tpu.memory_space<vmem>>, vector<8x16xbf16>
    tpu.vector_store %arg6[%c8_58, %c16_59], %130 {strides = array<i32>} : memref<16x32xbf16, #tpu.memory_space<vmem>>, vector<8x16xbf16>,
    %c0_60 = arith.constant 0 : index
    %c0_61 = arith.constant 0 : index
    %132 = vector.load %arg6[%c0_60, %c0_61] : memref<16x32xbf16, #tpu.memory_space<vmem>>, vector<16x32xbf16>
    %cst_62 = arith.constant dense<0.000000e+00> : vector<16x32xf32>
    %133 = tpu.matmul %132, %4, %cst_62 {dimension_numbers = #tpu.dot_dimension_numbers<[1], [0], [0], [1], [0, 0, 1, 1], [], []>} : vector<16x32xbf16>, vector<32x32xbf16>, vector<16x32xf32> -> vector<16x32xf32>
    %134 = vector.broadcast %16 : vector<1x32xf32> to vector<16x32xf32>
    %135 = arith.addf %133, %134 : vector<16x32xf32>
    %136 = arith.addf %0, %135 : vector<16x32xf32>
    %cst_63 = arith.constant dense<0.000000e+00> : vector<16xf32>
    %137 = vector.multi_reduction <add>, %136, %cst_63 [1] : vector<16x32xf32> to vector<16xf32>
    %138 = vector.shape_cast %137 : vector<16xf32> to vector<16x1xf32>
    %cst_64 = arith.constant 3.200000e+01 : f32
    %139 = vector.broadcast %cst_64 : f32 to vector<16x1xf32>
    %140 = arith.divf %138, %139 : vector<16x1xf32>
    %141 = vector.broadcast %140 : vector<16x1xf32> to vector<16x32xf32>
    %142 = arith.subf %136, %141 : vector<16x32xf32>
    %143 = arith.mulf %142, %142 : vector<16x32xf32>
    %cst_65 = arith.constant dense<0.000000e+00> : vector<16xf32>
    %144 = vector.multi_reduction <add>, %143, %cst_65 [1] : vector<16x32xf32> to vector<16xf32>
    %145 = vector.shape_cast %144 : vector<16xf32> to vector<16x1xf32>
    %cst_66 = arith.constant 3.200000e+01 : f32
    %146 = vector.broadcast %cst_66 : f32 to vector<16x1xf32>
    %147 = arith.divf %145, %146 : vector<16x1xf32>
    %148 = vector.broadcast %140 : vector<16x1xf32> to vector<16x32xf32>
    %149 = arith.subf %136, %148 : vector<16x32xf32>
    %cst_67 = arith.constant 9.99999974E-6 : f32
    %150 = vector.broadcast %cst_67 : f32 to vector<16x1xf32>
    %151 = arith.addf %147, %150 : vector<16x1xf32>
    %152 = math.rsqrt %151 : vector<16x1xf32>
    %153 = vector.broadcast %152 : vector<16x1xf32> to vector<16x32xf32>
    %154 = arith.mulf %149, %153 : vector<16x32xf32>
    %155 = vector.broadcast %18 : vector<1x32xf32> to vector<16x32xf32>
    %156 = arith.mulf %154, %155 : vector<16x32xf32>
    %157 = vector.broadcast %20 : vector<1x32xf32> to vector<16x32xf32>
    %158 = arith.addf %156, %157 : vector<16x32xf32>
    %159 = arith.truncf %158 : vector<16x32xf32> to vector<16x32xbf16>
    %cst_68 = arith.constant dense<0.000000e+00> : vector<16x64xf32>
    %160 = tpu.matmul %159, %6, %cst_68 {dimension_numbers = #tpu.dot_dimension_numbers<[1], [0], [0], [1], [0, 0, 1, 1], [], []>} : vector<16x32xbf16>, vector<32x64xbf16>, vector<16x64xf32> -> vector<16x64xf32>
    %161 = vector.broadcast %22 : vector<1x64xf32> to vector<16x64xf32>
    %162 = arith.addf %160, %161 : vector<16x64xf32>
    %cst_69 = arith.constant 1.702000e+00 : f32
    %163 = vector.broadcast %cst_69 : f32 to vector<16x64xf32>
    %164 = arith.mulf %163, %162 : vector<16x64xf32>
    %165 = arith.negf %164 : vector<16x64xf32>
    %166 = math.exp %165 : vector<16x64xf32>
    %cst_70 = arith.constant 1.000000e+00 : f32
    %167 = vector.broadcast %cst_70 : f32 to vector<16x64xf32>
    %168 = arith.addf %167, %166 : vector<16x64xf32>
    %169 = arith.divf %167, %168 : vector<16x64xf32>
    %170 = arith.mulf %162, %169 : vector<16x64xf32>
    %171 = arith.truncf %170 : vector<16x64xf32> to vector<16x64xbf16>
    %cst_71 = arith.constant dense<0.000000e+00> : vector<16x32xf32>
    %172 = tpu.matmul %171, %8, %cst_71 {dimension_numbers = #tpu.dot_dimension_numbers<[1], [0], [0], [1], [0, 0, 1, 1], [], []>} : vector<16x64xbf16>, vector<64x32xbf16>, vector<16x32xf32> -> vector<16x32xf32>
    %173 = vector.broadcast %24 : vector<1x32xf32> to vector<16x32xf32>
    %174 = arith.addf %172, %173 : vector<16x32xf32>
    %175 = arith.addf %136, %174 : vector<16x32xf32>
    %c1_72 = arith.constant 1 : index
    %c0_73 = arith.constant 0 : index
    %c0_74 = arith.constant 0 : index
    %176 = vector.load %arg3[%c1_72, %c0_73, %c0_74] : memref<2x96x192xbf16, #tpu.memory_space<vmem>>, vector<1x32x96xbf16>
    %177 = vector.shape_cast %176 : vector<1x32x96xbf16> to vector<32x96xbf16>
    %c1_75 = arith.constant 1 : index
    %c0_76 = arith.constant 0 : index
    %c96_77 = arith.constant 96 : index
    %178 = vector.load %arg3[%c1_75, %c0_76, %c96_77] : memref<2x96x192xbf16, #tpu.memory_space<vmem>>, vector<1x32x32xbf16>
    %179 = vector.shape_cast %178 : vector<1x32x32xbf16> to vector<32x32xbf16>
    %c1_78 = arith.constant 1 : index
    %c0_79 = arith.constant 0 : index
    %c128_80 = arith.constant 128 : index
    %180 = vector.load %arg3[%c1_78, %c0_79, %c128_80] : memref<2x96x192xbf16, #tpu.memory_space<vmem>>, vector<1x32x64xbf16>
    %181 = vector.shape_cast %180 : vector<1x32x64xbf16> to vector<32x64xbf16>
    %c1_81 = arith.constant 1 : index
    %c32_82 = arith.constant 32 : index
    %c0_83 = arith.constant 0 : index
    %182 = vector.load %arg3[%c1_81, %c32_82, %c0_83] : memref<2x96x192xbf16, #tpu.memory_space<vmem>>, vector<1x64x32xbf16>
    %183 = vector.shape_cast %182 : vector<1x64x32xbf16> to vector<64x32xbf16>
    %c1_84 = arith.constant 1 : index
    %c0_85 = arith.constant 0 : index
    %c0_86 = arith.constant 0 : index
    %184 = vector.load %arg4[%c1_84, %c0_85, %c0_86] : memref<2x8x96xf32, #tpu.memory_space<vmem>>, vector<1x1x32xf32>
    %185 = vector.shape_cast %184 : vector<1x1x32xf32> to vector<1x32xf32>
    %c1_87 = arith.constant 1 : index
    %c1_88 = arith.constant 1 : index
    %c0_89 = arith.constant 0 : index
    %186 = vector.load %arg4[%c1_87, %c1_88, %c0_89] : memref<2x8x96xf32, #tpu.memory_space<vmem>>, vector<1x1x32xf32>
    %187 = vector.shape_cast %186 : vector<1x1x32xf32> to vector<1x32xf32>
    %c1_90 = arith.constant 1 : index
    %c2_91 = arith.constant 2 : index
    %c0_92 = arith.constant 0 : index
    %188 = vector.load %arg4[%c1_90, %c2_91, %c0_92] : memref<2x8x96xf32, #tpu.memory_space<vmem>>, vector<1x1x96xf32>
    %189 = vector.shape_cast %188 : vector<1x1x96xf32> to vector<1x96xf32>
    %c1_93 = arith.constant 1 : index
    %c3_94 = arith.constant 3 : index
    %c0_95 = arith.constant 0 : index
    %190 = vector.load %arg4[%c1_93, %c3_94, %c0_95] : memref<2x8x96xf32, #tpu.memory_space<vmem>>, vector<1x1x32xf32>
    %191 = vector.shape_cast %190 : vector<1x1x32xf32> to vector<1x32xf32>
    %c1_96 = arith.constant 1 : index
    %c4_97 = arith.constant 4 : index
    %c0_98 = arith.constant 0 : index
    %192 = vector.load %arg4[%c1_96, %c4_97, %c0_98] : memref<2x8x96xf32, #tpu.memory_space<vmem>>, vector<1x1x32xf32>
    %193 = vector.shape_cast %192 : vector<1x1x32xf32> to vector<1x32xf32>
    %c1_99 = arith.constant 1 : index
    %c5_100 = arith.constant 5 : index
    %c0_101 = arith.constant 0 : index
    %194 = vector.load %arg4[%c1_99, %c5_100, %c0_101] : memref<2x8x96xf32, #tpu.memory_space<vmem>>, vector<1x1x32xf32>
    %195 = vector.shape_cast %194 : vector<1x1x32xf32> to vector<1x32xf32>
    %c1_102 = arith.constant 1 : index
    %c6_103 = arith.constant 6 : index
    %c0_104 = arith.constant 0 : index
    %196 = vector.load %arg4[%c1_102, %c6_103, %c0_104] : memref<2x8x96xf32, #tpu.memory_space<vmem>>, vector<1x1x64xf32>
    %197 = vector.shape_cast %196 : vector<1x1x64xf32> to vector<1x64xf32>
    %c1_105 = arith.constant 1 : index
    %c7_106 = arith.constant 7 : index
    %c0_107 = arith.constant 0 : index
    %198 = vector.load %arg4[%c1_105, %c7_106, %c0_107] : memref<2x8x96xf32, #tpu.memory_space<vmem>>, vector<1x1x32xf32>
    %199 = vector.shape_cast %198 : vector<1x1x32xf32> to vector<1x32xf32>
    %cst_108 = arith.constant dense<0.000000e+00> : vector<16xf32>
    %200 = vector.multi_reduction <add>, %175, %cst_108 [1] : vector<16x32xf32> to vector<16xf32>
    %201 = vector.shape_cast %200 : vector<16xf32> to vector<16x1xf32>
    %cst_109 = arith.constant 3.200000e+01 : f32
    %202 = vector.broadcast %cst_109 : f32 to vector<16x1xf32>
    %203 = arith.divf %201, %202 : vector<16x1xf32>
    %204 = vector.broadcast %203 : vector<16x1xf32> to vector<16x32xf32>
    %205 = arith.subf %175, %204 : vector<16x32xf32>
    %206 = arith.mulf %205, %205 : vector<16x32xf32>
    %cst_110 = arith.constant dense<0.000000e+00> : vector<16xf32>
    %207 = vector.multi_reduction <add>, %206, %cst_110 [1] : vector<16x32xf32> to vector<16xf32>
    %208 = vector.shape_cast %207 : vector<16xf32> to vector<16x1xf32>
    %cst_111 = arith.constant 3.200000e+01 : f32
    %209 = vector.broadcast %cst_111 : f32 to vector<16x1xf32>
    %210 = arith.divf %208, %209 : vector<16x1xf32>
    %211 = vector.broadcast %203 : vector<16x1xf32> to vector<16x32xf32>
    %212 = arith.subf %175, %211 : vector<16x32xf32>
    %cst_112 = arith.constant 9.99999974E-6 : f32
    %213 = vector.broadcast %cst_112 : f32 to vector<16x1xf32>
    %214 = arith.addf %210, %213 : vector<16x1xf32>
    %215 = math.rsqrt %214 : vector<16x1xf32>
    %216 = vector.broadcast %215 : vector<16x1xf32> to vector<16x32xf32>
    %217 = arith.mulf %212, %216 : vector<16x32xf32>
    %218 = vector.broadcast %185 : vector<1x32xf32> to vector<16x32xf32>
    %219 = arith.mulf %217, %218 : vector<16x32xf32>
    %220 = vector.broadcast %187 : vector<1x32xf32> to vector<16x32xf32>
    %221 = arith.addf %219, %220 : vector<16x32xf32>
    %222 = arith.truncf %221 : vector<16x32xf32> to vector<16x32xbf16>
    %cst_113 = arith.constant dense<0.000000e+00> : vector<16x96xf32>
    %223 = tpu.matmul %222, %177, %cst_113 {dimension_numbers = #tpu.dot_dimension_numbers<[1], [0], [0], [1], [0, 0, 1, 1], [], []>} : vector<16x32xbf16>, vector<32x96xbf16>, vector<16x96xf32> -> vector<16x96xf32>
    %224 = vector.broadcast %189 : vector<1x96xf32> to vector<16x96xf32>
    %225 = arith.addf %223, %224 : vector<16x96xf32>
    %226 = arith.truncf %225 : vector<16x96xf32> to vector<16x96xbf16>
    %c0_114 = arith.constant 0 : index
    %c0_115 = arith.constant 0 : index
    %c0_116 = arith.constant 0 : index
    %227 = vector.load %arg2[%c0_114, %c0_115, %c0_116] : memref<2x1x8xf32, #tpu.memory_space<vmem>>, vector<1x1x8xf32>
    %228 = vector.shape_cast %227 : vector<1x1x8xf32> to vector<1x8xf32>
    %229 = vector.extract_strided_slice %226 {offsets = [0, 0], sizes = [8, 16], strides = [1, 1]} : vector<16x96xbf16> to vector<8x16xbf16>
    %230 = vector.extract_strided_slice %226 {offsets = [0, 32], sizes = [8, 16], strides = [1, 1]} : vector<16x96xbf16> to vector<8x16xbf16>
    %231 = vector.extract_strided_slice %226 {offsets = [0, 64], sizes = [8, 16], strides = [1, 1]} : vector<16x96xbf16> to vector<8x16xbf16>
    %cst_117 = arith.constant dense<0.000000e+00> : vector<8x8xf32>
    %232 = tpu.matmul %229, %230, %cst_117 {dimension_numbers = #tpu.dot_dimension_numbers<[1], [1], [0], [0], [0, 0, 1, 0], [], []>} : vector<8x16xbf16>, vector<8x16xbf16>, vector<8x8xf32> -> vector<8x8xf32>
    %233 = vector.broadcast %228 : vector<1x8xf32> to vector<8x8xf32>
    %234 = arith.addf %232, %233 : vector<8x8xf32>
    %cst_118 = arith.constant dense<0xFF800000> : vector<8xf32>
    %235 = vector.multi_reduction <maximumf>, %234, %cst_118 [1] : vector<8x8xf32> to vector<8xf32>
    %236 = vector.shape_cast %235 : vector<8xf32> to vector<8x1xf32>
    %237 = vector.broadcast %236 : vector<8x1xf32> to vector<8x8xf32>
    %238 = arith.subf %234, %237 : vector<8x8xf32>
    %239 = math.exp %238 : vector<8x8xf32>
    %cst_119 = arith.constant dense<0.000000e+00> : vector<8xf32>
    %240 = vector.multi_reduction <add>, %239, %cst_119 [1] : vector<8x8xf32> to vector<8xf32>
    %241 = vector.shape_cast %240 : vector<8xf32> to vector<8x1xf32>
    %242 = vector.broadcast %241 : vector<8x1xf32> to vector<8x8xf32>
    %243 = arith.divf %239, %242 : vector<8x8xf32>
    %244 = arith.truncf %243 : vector<8x8xf32> to vector<8x8xbf16>
    %cst_120 = arith.constant dense<0.000000e+00> : vector<8x16xf32>
    %245 = tpu.matmul %244, %231, %cst_120 {dimension_numbers = #tpu.dot_dimension_numbers<[1], [0], [0], [1], [0, 0, 1, 1], [], []>} : vector<8x8xbf16>, vector<8x16xbf16>, vector<8x16xf32> -> vector<8x16xf32>
    %246 = arith.truncf %245 : vector<8x16xf32> to vector<8x16xbf16>
    %c0_121 = arith.constant 0 : index
    %c0_122 = arith.constant 0 : index
    %247 = vector.load %arg6[%c0_121, %c0_122] : memref<16x32xbf16, #tpu.memory_space<vmem>>, vector<8x16xbf16>
    tpu.vector_store %arg6[%c0_121, %c0_122], %246 {strides = array<i32>} : memref<16x32xbf16, #tpu.memory_space<vmem>>, vector<8x16xbf16>,
    %248 = vector.extract_strided_slice %226 {offsets = [0, 16], sizes = [8, 16], strides = [1, 1]} : vector<16x96xbf16> to vector<8x16xbf16>
    %249 = vector.extract_strided_slice %226 {offsets = [0, 48], sizes = [8, 16], strides = [1, 1]} : vector<16x96xbf16> to vector<8x16xbf16>
    %250 = vector.extract_strided_slice %226 {offsets = [0, 80], sizes = [8, 16], strides = [1, 1]} : vector<16x96xbf16> to vector<8x16xbf16>
    %cst_123 = arith.constant dense<0.000000e+00> : vector<8x8xf32>
    %251 = tpu.matmul %248, %249, %cst_123 {dimension_numbers = #tpu.dot_dimension_numbers<[1], [1], [0], [0], [0, 0, 1, 0], [], []>} : vector<8x16xbf16>, vector<8x16xbf16>, vector<8x8xf32> -> vector<8x8xf32>
    %252 = vector.broadcast %228 : vector<1x8xf32> to vector<8x8xf32>
    %253 = arith.addf %251, %252 : vector<8x8xf32>
    %cst_124 = arith.constant dense<0xFF800000> : vector<8xf32>
    %254 = vector.multi_reduction <maximumf>, %253, %cst_124 [1] : vector<8x8xf32> to vector<8xf32>
    %255 = vector.shape_cast %254 : vector<8xf32> to vector<8x1xf32>
    %256 = vector.broadcast %255 : vector<8x1xf32> to vector<8x8xf32>
    %257 = arith.subf %253, %256 : vector<8x8xf32>
    %258 = math.exp %257 : vector<8x8xf32>
    %cst_125 = arith.constant dense<0.000000e+00> : vector<8xf32>
    %259 = vector.multi_reduction <add>, %258, %cst_125 [1] : vector<8x8xf32> to vector<8xf32>
    %260 = vector.shape_cast %259 : vector<8xf32> to vector<8x1xf32>
    %261 = vector.broadcast %260 : vector<8x1xf32> to vector<8x8xf32>
    %262 = arith.divf %258, %261 : vector<8x8xf32>
    %263 = arith.truncf %262 : vector<8x8xf32> to vector<8x8xbf16>
    %cst_126 = arith.constant dense<0.000000e+00> : vector<8x16xf32>
    %264 = tpu.matmul %263, %250, %cst_126 {dimension_numbers = #tpu.dot_dimension_numbers<[1], [0], [0], [1], [0, 0, 1, 1], [], []>} : vector<8x8xbf16>, vector<8x16xbf16>, vector<8x16xf32> -> vector<8x16xf32>
    %265 = arith.truncf %264 : vector<8x16xf32> to vector<8x16xbf16>
    %c0_127 = arith.constant 0 : index
    %c16_128 = arith.constant 16 : index
    %266 = vector.load %arg6[%c0_127, %c16_128] : memref<16x32xbf16, #tpu.memory_space<vmem>>, vector<8x16xbf16>
    tpu.vector_store %arg6[%c0_127, %c16_128], %265 {strides = array<i32>} : memref<16x32xbf16, #tpu.memory_space<vmem>>, vector<8x16xbf16>,
    %c1_129 = arith.constant 1 : index
    %c0_130 = arith.constant 0 : index
    %c0_131 = arith.constant 0 : index
    %267 = vector.load %arg2[%c1_129, %c0_130, %c0_131] : memref<2x1x8xf32, #tpu.memory_space<vmem>>, vector<1x1x8xf32>
    %268 = vector.shape_cast %267 : vector<1x1x8xf32> to vector<1x8xf32>
    %269 = vector.extract_strided_slice %226 {offsets = [8, 0], sizes = [8, 16], strides = [1, 1]} : vector<16x96xbf16> to vector<8x16xbf16>
    %270 = vector.extract_strided_slice %226 {offsets = [8, 32], sizes = [8, 16], strides = [1, 1]} : vector<16x96xbf16> to vector<8x16xbf16>
    %271 = vector.extract_strided_slice %226 {offsets = [8, 64], sizes = [8, 16], strides = [1, 1]} : vector<16x96xbf16> to vector<8x16xbf16>
    %cst_132 = arith.constant dense<0.000000e+00> : vector<8x8xf32>
    %272 = tpu.matmul %269, %270, %cst_132 {dimension_numbers = #tpu.dot_dimension_numbers<[1], [1], [0], [0], [0, 0, 1, 0], [], []>} : vector<8x16xbf16>, vector<8x16xbf16>, vector<8x8xf32> -> vector<8x8xf32>
    %273 = vector.broadcast %268 : vector<1x8xf32> to vector<8x8xf32>
    %274 = arith.addf %272, %273 : vector<8x8xf32>
    %cst_133 = arith.constant dense<0xFF800000> : vector<8xf32>
    %275 = vector.multi_reduction <maximumf>, %274, %cst_133 [1] : vector<8x8xf32> to vector<8xf32>
    %276 = vector.shape_cast %275 : vector<8xf32> to vector<8x1xf32>
    %277 = vector.broadcast %276 : vector<8x1xf32> to vector<8x8xf32>
    %278 = arith.subf %274, %277 : vector<8x8xf32>
    %279 = math.exp %278 : vector<8x8xf32>
    %cst_134 = arith.constant dense<0.000000e+00> : vector<8xf32>
    %280 = vector.multi_reduction <add>, %279, %cst_134 [1] : vector<8x8xf32> to vector<8xf32>
    %281 = vector.shape_cast %280 : vector<8xf32> to vector<8x1xf32>
    %282 = vector.broadcast %281 : vector<8x1xf32> to vector<8x8xf32>
    %283 = arith.divf %279, %282 : vector<8x8xf32>
    %284 = arith.truncf %283 : vector<8x8xf32> to vector<8x8xbf16>
    %cst_135 = arith.constant dense<0.000000e+00> : vector<8x16xf32>
    %285 = tpu.matmul %284, %271, %cst_135 {dimension_numbers = #tpu.dot_dimension_numbers<[1], [0], [0], [1], [0, 0, 1, 1], [], []>} : vector<8x8xbf16>, vector<8x16xbf16>, vector<8x16xf32> -> vector<8x16xf32>
    %286 = arith.truncf %285 : vector<8x16xf32> to vector<8x16xbf16>
    %c8_136 = arith.constant 8 : index
    %c0_137 = arith.constant 0 : index
    %287 = vector.load %arg6[%c8_136, %c0_137] : memref<16x32xbf16, #tpu.memory_space<vmem>>, vector<8x16xbf16>
    tpu.vector_store %arg6[%c8_136, %c0_137], %286 {strides = array<i32>} : memref<16x32xbf16, #tpu.memory_space<vmem>>, vector<8x16xbf16>,
    %288 = vector.extract_strided_slice %226 {offsets = [8, 16], sizes = [8, 16], strides = [1, 1]} : vector<16x96xbf16> to vector<8x16xbf16>
    %289 = vector.extract_strided_slice %226 {offsets = [8, 48], sizes = [8, 16], strides = [1, 1]} : vector<16x96xbf16> to vector<8x16xbf16>
    %290 = vector.extract_strided_slice %226 {offsets = [8, 80], sizes = [8, 16], strides = [1, 1]} : vector<16x96xbf16> to vector<8x16xbf16>
    %cst_138 = arith.constant dense<0.000000e+00> : vector<8x8xf32>
    %291 = tpu.matmul %288, %289, %cst_138 {dimension_numbers = #tpu.dot_dimension_numbers<[1], [1], [0], [0], [0, 0, 1, 0], [], []>} : vector<8x16xbf16>, vector<8x16xbf16>, vector<8x8xf32> -> vector<8x8xf32>
    %292 = vector.broadcast %268 : vector<1x8xf32> to vector<8x8xf32>
    %293 = arith.addf %291, %292 : vector<8x8xf32>
    %cst_139 = arith.constant dense<0xFF800000> : vector<8xf32>
    %294 = vector.multi_reduction <maximumf>, %293, %cst_139 [1] : vector<8x8xf32> to vector<8xf32>
    %295 = vector.shape_cast %294 : vector<8xf32> to vector<8x1xf32>
    %296 = vector.broadcast %295 : vector<8x1xf32> to vector<8x8xf32>
    %297 = arith.subf %293, %296 : vector<8x8xf32>
    %298 = math.exp %297 : vector<8x8xf32>
    %cst_140 = arith.constant dense<0.000000e+00> : vector<8xf32>
    %299 = vector.multi_reduction <add>, %298, %cst_140 [1] : vector<8x8xf32> to vector<8xf32>
    %300 = vector.shape_cast %299 : vector<8xf32> to vector<8x1xf32>
    %301 = vector.broadcast %300 : vector<8x1xf32> to vector<8x8xf32>
    %302 = arith.divf %298, %301 : vector<8x8xf32>
    %303 = arith.truncf %302 : vector<8x8xf32> to vector<8x8xbf16>
    %cst_141 = arith.constant dense<0.000000e+00> : vector<8x16xf32>
    %304 = tpu.matmul %303, %290, %cst_141 {dimension_numbers = #tpu.dot_dimension_numbers<[1], [0], [0], [1], [0, 0, 1, 1], [], []>} : vector<8x8xbf16>, vector<8x16xbf16>, vector<8x16xf32> -> vector<8x16xf32>
    %305 = arith.truncf %304 : vector<8x16xf32> to vector<8x16xbf16>
    %c8_142 = arith.constant 8 : index
    %c16_143 = arith.constant 16 : index
    %306 = vector.load %arg6[%c8_142, %c16_143] : memref<16x32xbf16, #tpu.memory_space<vmem>>, vector<8x16xbf16>
    tpu.vector_store %arg6[%c8_142, %c16_143], %305 {strides = array<i32>} : memref<16x32xbf16, #tpu.memory_space<vmem>>, vector<8x16xbf16>,
    %c0_144 = arith.constant 0 : index
    %c0_145 = arith.constant 0 : index
    %307 = vector.load %arg6[%c0_144, %c0_145] : memref<16x32xbf16, #tpu.memory_space<vmem>>, vector<16x32xbf16>
    %cst_146 = arith.constant dense<0.000000e+00> : vector<16x32xf32>
    %308 = tpu.matmul %307, %179, %cst_146 {dimension_numbers = #tpu.dot_dimension_numbers<[1], [0], [0], [1], [0, 0, 1, 1], [], []>} : vector<16x32xbf16>, vector<32x32xbf16>, vector<16x32xf32> -> vector<16x32xf32>
    %309 = vector.broadcast %191 : vector<1x32xf32> to vector<16x32xf32>
    %310 = arith.addf %308, %309 : vector<16x32xf32>
    %311 = arith.addf %175, %310 : vector<16x32xf32>
    %cst_147 = arith.constant dense<0.000000e+00> : vector<16xf32>
    %312 = vector.multi_reduction <add>, %311, %cst_147 [1] : vector<16x32xf32> to vector<16xf32>
    %313 = vector.shape_cast %312 : vector<16xf32> to vector<16x1xf32>
    %cst_148 = arith.constant 3.200000e+01 : f32
    %314 = vector.broadcast %cst_148 : f32 to vector<16x1xf32>
    %315 = arith.divf %313, %314 : vector<16x1xf32>
    %316 = vector.broadcast %315 : vector<16x1xf32> to vector<16x32xf32>
    %317 = arith.subf %311, %316 : vector<16x32xf32>
    %318 = arith.mulf %317, %317 : vector<16x32xf32>
    %cst_149 = arith.constant dense<0.000000e+00> : vector<16xf32>
    %319 = vector.multi_reduction <add>, %318, %cst_149 [1] : vector<16x32xf32> to vector<16xf32>
    %320 = vector.shape_cast %319 : vector<16xf32> to vector<16x1xf32>
    %cst_150 = arith.constant 3.200000e+01 : f32
    %321 = vector.broadcast %cst_150 : f32 to vector<16x1xf32>
    %322 = arith.divf %320, %321 : vector<16x1xf32>
    %323 = vector.broadcast %315 : vector<16x1xf32> to vector<16x32xf32>
    %324 = arith.subf %311, %323 : vector<16x32xf32>
    %cst_151 = arith.constant 9.99999974E-6 : f32
    %325 = vector.broadcast %cst_151 : f32 to vector<16x1xf32>
    %326 = arith.addf %322, %325 : vector<16x1xf32>
    %327 = math.rsqrt %326 : vector<16x1xf32>
    %328 = vector.broadcast %327 : vector<16x1xf32> to vector<16x32xf32>
    %329 = arith.mulf %324, %328 : vector<16x32xf32>
    %330 = vector.broadcast %193 : vector<1x32xf32> to vector<16x32xf32>
    %331 = arith.mulf %329, %330 : vector<16x32xf32>
    %332 = vector.broadcast %195 : vector<1x32xf32> to vector<16x32xf32>
    %333 = arith.addf %331, %332 : vector<16x32xf32>
    %334 = arith.truncf %333 : vector<16x32xf32> to vector<16x32xbf16>
    %cst_152 = arith.constant dense<0.000000e+00> : vector<16x64xf32>
    %335 = tpu.matmul %334, %181, %cst_152 {dimension_numbers = #tpu.dot_dimension_numbers<[1], [0], [0], [1], [0, 0, 1, 1], [], []>} : vector<16x32xbf16>, vector<32x64xbf16>, vector<16x64xf32> -> vector<16x64xf32>
    %336 = vector.broadcast %197 : vector<1x64xf32> to vector<16x64xf32>
    %337 = arith.addf %335, %336 : vector<16x64xf32>
    %cst_153 = arith.constant 1.702000e+00 : f32
    %338 = vector.broadcast %cst_153 : f32 to vector<16x64xf32>
    %339 = arith.mulf %338, %337 : vector<16x64xf32>
    %340 = arith.negf %339 : vector<16x64xf32>
    %341 = math.exp %340 : vector<16x64xf32>
    %cst_154 = arith.constant 1.000000e+00 : f32
    %342 = vector.broadcast %cst_154 : f32 to vector<16x64xf32>
    %343 = arith.addf %342, %341 : vector<16x64xf32>
    %344 = arith.divf %342, %343 : vector<16x64xf32>
    %345 = arith.mulf %337, %344 : vector<16x64xf32>
    %346 = arith.truncf %345 : vector<16x64xf32> to vector<16x64xbf16>
    %cst_155 = arith.constant dense<0.000000e+00> : vector<16x32xf32>
    %347 = tpu.matmul %346, %183, %cst_155 {dimension_numbers = #tpu.dot_dimension_numbers<[1], [0], [0], [1], [0, 0, 1, 1], [], []>} : vector<16x64xbf16>, vector<64x32xbf16>, vector<16x32xf32> -> vector<16x32xf32>
    %348 = vector.broadcast %199 : vector<1x32xf32> to vector<16x32xf32>
    %349 = arith.addf %347, %348 : vector<16x32xf32>
    %350 = arith.addf %311, %349 : vector<16x32xf32>
    %c0_156 = arith.constant 0 : index
    %c0_157 = arith.constant 0 : index
    %351 = vector.load %arg5[%c0_156, %c0_157] : memref<16x32xf32, #tpu.memory_space<vmem>>, vector<16x32xf32>
    tpu.vector_store %arg5[%c0_156, %c0_157], %350 {strides = array<i32>} : memref<16x32xf32, #tpu.memory_space<vmem>>, vector<16x32xf32>,
    return
  }
  func.func @transform_0(%arg0: i32) -> (i32, i32) {
    %c0_i32 = arith.constant 0 : i32
    %c0_i32_0 = arith.constant 0 : i32
    %c0_i32_1 = arith.constant 0 : i32
    return %c0_i32, %c0_i32_0 : i32, i32
  }
  func.func @transform_1(%arg0: i32) -> (i32, i32, i32) {
    %c0_i32 = arith.constant 0 : i32
    %c0_i32_0 = arith.constant 0 : i32
    %c0_i32_1 = arith.constant 0 : i32
    %c0_i32_2 = arith.constant 0 : i32
    return %c0_i32, %c0_i32_0, %c0_i32_1 : i32, i32, i32
  }
  func.func @transform_2(%arg0: i32) -> (i32, i32, i32) {
    %c0_i32 = arith.constant 0 : i32
    %c0_i32_0 = arith.constant 0 : i32
    %c0_i32_1 = arith.constant 0 : i32
    %c0_i32_2 = arith.constant 0 : i32
    return %c0_i32, %c0_i32_0, %c0_i32_1 : i32, i32, i32
  }
  func.func @transform_3(%arg0: i32) -> (i32, i32, i32) {
    %c0_i32 = arith.constant 0 : i32
    %c0_i32_0 = arith.constant 0 : i32
    %c0_i32_1 = arith.constant 0 : i32
    %c0_i32_2 = arith.constant 0 : i32
    return %c0_i32, %c0_i32_0, %c0_i32_1 : i32, i32, i32
  }
  func.func @transform_4(%arg0: i32) -> (i32, i32) {
    %c0_i32 = arith.constant 0 : i32
    %c0_i32_0 = arith.constant 0 : i32
    %c0_i32_1 = arith.constant 0 : i32
    return %c0_i32, %c0_i32_0 : i32, i32
  }
}

</mosaic_0001>

<llo_original>
// kernel: tpu_custom_call.1
$region0: #{tpu_custom_call.1}
  #allocation0 [shape = 'u32[]', space=smem, size = 0x4, offset = 0x4, fixed_abs, tag = 'smem constant byte address 0x4 - core index']
  #allocation1 [shape = 'u32[144,128]{1,0:T(1,128)}', space=vmem, size = 0x12000, scoped, tag = 'internal scratch']
  #allocation2 [shape = 'bf16[16,32]{1,0:T(8,128)(2,1)}', space=vmem, size = 0x1000, scoped, tag = 'scratch operand']
  %s0 = inlined_call_operand.hbm [shape: f32[16,32], index: 0, kind: input, shape index: {}]
  %s1 = inlined_call_operand.hbm [shape: f32[2,1,8], index: 1, kind: input, shape index: {}]
  %s2 = inlined_call_operand.hbm [shape: bf16[2,96,192], index: 2, kind: input, shape index: {}]
  %s3 = inlined_call_operand.hbm [shape: f32[2,8,96], index: 3, kind: input, shape index: {}]
  %s4 = inlined_call_operand.hbm [shape: f32[16,32], index: 4, kind: output, shape index: {}]
  %s5 = sld [smem:[#allocation0]]
  $region42: #{tpu_custom_call.1} parent=0
    _
  %s7 = ssub.s32 1, %s5
  %s8 = scalar_select 0, %s7, %s5
  $region1: #{tpu_custom_call.1} parent=0
    #allocation3 [shape = 'u8[8192]{0}', space=vmem, size = 0x2000, scoped, tag = 'input window, operand 0, single buffered']
    #allocation4 [shape = 's32[1]{0}', space=sflag, size = 0x4, scoped, tag = 'scoped memory for tpu_custom_call.1']
    #allocation5 [shape = 's32[1]{0}', space=sflag, size = 0x4, scoped, tag = 'scoped memory for tpu_custom_call.1']
    #allocation6 [shape = 'u8[1024]{0}', space=vmem, size = 0x400, scoped, tag = 'input window, operand 1, single buffered']
    #allocation7 [shape = 's32[1]{0}', space=sflag, size = 0x4, scoped, tag = 'scoped memory for tpu_custom_call.1']
    #allocation8 [shape = 'u8[98304]{0}', space=vmem, size = 0x18000, scoped, tag = 'input window, operand 2, single buffered']
    #allocation9 [shape = 'u8[8192]{0}', space=vmem, size = 0x2000, scoped, tag = 'input window, operand 3, single buffered']
    #allocation10 [shape = 's32[1]{0}', space=sflag, size = 0x4, scoped, tag = 'scoped memory for tpu_custom_call.1']
    #allocation11 [shape = 'u8[8192]{0}', space=vmem, size = 0x2000, scoped, tag = 'output window, operand 0, single buffered']
    %9 = vsyncpa [#allocation4], 0
    %10 = vsyncpa [#allocation7], 0
    %11 = vsyncpa [#allocation10], 0
    %12 = vsyncpa [#allocation5], 0
    // Predicated region
    $region2: #{tpu_custom_call.1} parent=1 // pred_check
      _
    $region3: #{tpu_custom_call.1} parent=1 // pred_check_branch
      %14 = sbr.rel (0) target = $region5
    $region4: #{tpu_custom_call.1} parent=1 // pred_region
      %s16 = ssub.s32 256, 256
      %17 = vsyncadd [#allocation4], %s16
      %s18 = sshll.u32 [#allocation3], 4
      %s19 = int_to_ptr.vmem [resolvable:$true] %s18
      %24 = dma.hbm_to_vmem [thread:$0]  %s0, 256, %s19, [#allocation4], 128, 128, 8
    $region5: #{tpu_custom_call.1} parent=1 // pred_fallthru
      _
    // Predicated region
    $region6: #{tpu_custom_call.1} parent=1 // pred_check
      _
    $region7: #{tpu_custom_call.1} parent=1 // pred_check_branch
      %26 = sbr.rel (0) target = $region9
    $region8: #{tpu_custom_call.1} parent=1 // pred_region
      %s28 = ssub.s32 32, 32
      %29 = vsyncadd [#allocation7], %s28
      %s30 = sshll.u32 [#allocation6], 4
      %s31 = int_to_ptr.vmem [resolvable:$true] %s30
      %36 = dma.hbm_to_vmem [thread:$0]  %s1, 32, %s31, [#allocation7], 16, 16, 1
    $region9: #{tpu_custom_call.1} parent=1 // pred_fallthru
      _
    // Predicated region
    $region10: #{tpu_custom_call.1} parent=1 // pred_check
      _
    $region11: #{tpu_custom_call.1} parent=1 // pred_check_branch
      %38 = sbr.rel (0) target = $region13
    $region12: #{tpu_custom_call.1} parent=1 // pred_region
      %s40 = ssub.s32 3072, 3072
      %41 = vsyncadd [#allocation7], %s40
      %s42 = sshll.u32 [#allocation8], 4
      %s43 = int_to_ptr.vmem [resolvable:$true] %s42
      %48 = dma.hbm_to_vmem [thread:$0]  %s2, 3072, %s43, [#allocation7], 128, 128, 8
    $region13: #{tpu_custom_call.1} parent=1 // pred_fallthru
      _
    // Predicated region
    $region14: #{tpu_custom_call.1} parent=1 // pred_check
      _
    $region15: #{tpu_custom_call.1} parent=1 // pred_check_branch
      %50 = sbr.rel (0) target = $region17
    $region16: #{tpu_custom_call.1} parent=1 // pred_region
      %s52 = ssub.s32 256, 256
      %53 = vsyncadd [#allocation10], %s52
      %s54 = sshll.u32 [#allocation9], 4
      %s55 = int_to_ptr.vmem [resolvable:$true] %s54
      %60 = dma.hbm_to_vmem [thread:$0]  %s3, 256, %s55, [#allocation10], 128, 128, 8
    $region17: #{tpu_custom_call.1} parent=1 // pred_fallthru
      _
    // Predicated region
    $region18: #{tpu_custom_call.1} parent=1 // pred_check
      _
    $region19: #{tpu_custom_call.1} parent=1 // pred_check_branch
      %62 = sbr.rel (0) target = $region21
    $region20: #{tpu_custom_call.1} parent=1 // pred_region
      %63 = dma.done [#allocation4], 256
    $region21: #{tpu_custom_call.1} parent=1 // pred_fallthru
      _
    // Predicated region
    $region22: #{tpu_custom_call.1} parent=1 // pred_check
      _
    $region23: #{tpu_custom_call.1} parent=1 // pred_check_branch
      %65 = sbr.rel (0) target = $region25
    $region24: #{tpu_custom_call.1} parent=1 // pred_region
      %66 = dma.done [#allocation7], 32
    $region25: #{tpu_custom_call.1} parent=1 // pred_fallthru
      _
    // Predicated region
    $region26: #{tpu_custom_call.1} parent=1 // pred_check
      _
    $region27: #{tpu_custom_call.1} parent=1 // pred_check_branch
      %68 = sbr.rel (0) target = $region29
    $region28: #{tpu_custom_call.1} parent=1 // pred_region
      %69 = dma.done [#allocation7], 3072
    $region29: #{tpu_custom_call.1} parent=1 // pred_fallthru
      _
    // Predicated region
    $region30: #{tpu_custom_call.1} parent=1 // pred_check
      _
    $region31: #{tpu_custom_call.1} parent=1 // pred_check_branch
      %71 = sbr.rel (0) target = $region33
    $region32: #{tpu_custom_call.1} parent=1 // pred_region
      %72 = dma.done [#allocation10], 256
    $region33: #{tpu_custom_call.1} parent=1 // pred_fallthru
      _
    %v74 = vld [vmem:[#allocation3] sm:$0xff]
    %v75 = vld [vmem:[#allocation3 + $0x8] sm:$0xff]
    %v76 = vld [vmem:[#allocation8] sm:$0xf]
    %v77 = vld [vmem:[#allocation8 + $0x8] sm:$0xf]
    %v78 = vld [vmem:[#allocation8 + $0x10] sm:$0xf]
    %v79 = vld [vmem:[#allocation8 + $0x18] sm:$0xf]
    %v80 = vld [vmem:[#allocation8 + $0x4] sm:$0xf]
    %v81 = vld [vmem:[#allocation8 + $0xc] sm:$0xf]
    %v82 = vld [vmem:[#allocation8 + $0x14] sm:$0xf]
    %v83 = vld [vmem:[#allocation8 + $0x1c] sm:$0xf]
    %v84 = vld [vmem:[#allocation8 + $0x20] sm:$0xf]
    %v85 = vld [vmem:[#allocation8 + $0x28] sm:$0xf]
    %v86 = vld [vmem:[#allocation8 + $0x30] sm:$0xf]
    %v87 = vld [vmem:[#allocation8 + $0x38] sm:$0xf]
    %v88 = vld [vmem:[#allocation8 + $0x40] sm:$0xf]
    %v89 = vld [vmem:[#allocation8 + $0x48] sm:$0xf]
    %v90 = vld [vmem:[#allocation8 + $0x50] sm:$0xf]
    %v91 = vld [vmem:[#allocation8 + $0x58] sm:$0xf]
    %v92 = vld [vmem:[#allocation9] sm:$0x1]
    %v93 = vld [vmem:[#allocation9 + $0x1] sm:$0x1]
    %v94 = vld [vmem:[#allocation9 + $0x2] sm:$0x1]
    %v95 = vld [vmem:[#allocation9 + $0x3] sm:$0x1]
    %v96 = vld [vmem:[#allocation9 + $0x4] sm:$0x1]
    %v97 = vld [vmem:[#allocation9 + $0x5] sm:$0x1]
    %v98 = vld [vmem:[#allocation9 + $0x6] sm:$0x1]
    %v99 = vld [vmem:[#allocation9 + $0x7] sm:$0x1]
    %vm100 = vcmask 261120
    %v101 = vsel %vm100, %v74, 0.0
    %102 = vadd.xlane.f32.xlu0 %v101
    %v103 = vpop.xlane.xlu0 %102
    %v104 = vsel %vm100, %v75, 0.0
    %105 = vadd.xlane.f32.xlu0 %v104
    %v106 = vpop.xlane.xlu0 %105
    %v107 = vrcp.pop 32.0
    %v108 = vmul.f32 %v103, %v107
    %v109 = vmul.f32 %v106, %v107
    %v110 = vsub.f32 %v74, %v108
    %v111 = vsub.f32 %v75, %v109
    %v112 = vmul.f32 %v110, %v110
    %v113 = vmul.f32 %v111, %v111
    %v114 = vsel %vm100, %v112, 0.0
    %115 = vadd.xlane.f32.xlu0 %v114
    %v116 = vpop.xlane.xlu0 %115
    %v117 = vsel %vm100, %v113, 0.0
    %118 = vadd.xlane.f32.xlu0 %v117
    %v119 = vpop.xlane.xlu0 %118
    %v120 = vmul.f32 %v116, %v107
    %v121 = vmul.f32 %v119, %v107
    %v122 = vadd.f32 %v120, 1e-05
    %v123 = vadd.f32 %v121, 1e-05
    %v124 = vrsqrt.pop %v122
    %v125 = vrsqrt.pop %v123
    %v126 = vmul.f32 %v110, %v124
    %v127 = vmul.f32 %v111, %v125
    %v128 = vlaneseq
    %v129 = vshrl.u32 %v128, 7
    %v130 = vsub.s32 0, %v129
    %v131 = vrot.slane %v92, %v130
    %v132 = vmul.f32 %v126, %v131
    %v133 = vmul.f32 %v127, %v131
    %v134 = vlaneseq
    %v135 = vshrl.u32 %v134, 7
    %v136 = vsub.s32 0, %v135
    %v137 = vrot.slane %v93, %v136
    %v138 = vadd.f32 %v132, %v137
    %v139 = vadd.f32 %v133, %v137
    %v140 = vpack.c.bf16 %v139, %v138
    %v141 = vlaneseq
    %v142 = vshrl.u32 %v141, 7
    %v143 = vsub.s32 0, %v142
    %v144 = vrot.slane %v94, %v143
    %v149 = vunpack.c.l.b16 %v76
    %v150 = vunpack.c.l.b16 %v77
    %v151 = vunpack.c.l.b16 %v78
    %v152 = vunpack.c.l.b16 %v79
    %v153 = vpack.c.b16 %v150, %v149
    %v154 = vpack.c.b16 %v152, %v151
    %v158 = vsel %vm100, %v140, 0
    %160 = vmatprep.subr.bf16.mxu0 0
    %161 = vmatpush1.bf16.msra.mxu0 0
    %162 = vmatprep.subr.bf16.mxu0 0
    %163 = vmatpush1.bf16.msra.mxu0 0
    %164 = vmatprep.subr.bf16.mxu0 0
    %165 = vmatpush1.bf16.msra.mxu0 0
    %166 = vmatprep.subr.bf16.mxu0 0
    %167 = vmatpush1.bf16.msra.mxu0 0
    %168 = vmatprep.subr.bf16.mxu0 0
    %169 = vmatpush1.bf16.msra.mxu0 0
    %170 = vmatprep.subr.bf16.mxu0 0
    %171 = vmatpush1.bf16.msra.mxu0 0
    %172 = vmatprep.subr.bf16.mxu0 0
    %173 = vmatpush1.bf16.msra.mxu0 %v154
    %174 = vmatprep.subr.bf16.mxu0 0
    %175 = vmatpush1.bf16.msra.mxu0 %v153
    %176 = vmatprep.subr.bf16.mxu0 0
    %177 = vmatpush2.bf16.msra.mxu0 0
    %178 = vmatprep.subr.bf16.mxu0 0
    %179 = vmatpush2.bf16.msra.mxu0 0
    %180 = vmatprep.subr.bf16.mxu0 0
    %181 = vmatpush2.bf16.msra.mxu0 0
    %182 = vmatprep.subr.bf16.mxu0 0
    %183 = vmatpush2.bf16.msra.mxu0 0
    %184 = vmatprep.subr.bf16.mxu0 0
    %185 = vmatpush2.bf16.msra.mxu0 0
    %186 = vmatprep.subr.bf16.mxu0 0
    %187 = vmatpush2.bf16.msra.mxu0 0
    %188 = vmatprep.subr.bf16.mxu0 0
    %189 = vmatpush2.bf16.msra.mxu0 0
    %190 = vmatprep.subr.bf16.mxu0 0
    %191 = vmatpush2.bf16.msra.mxu0 0
    %192 = vmatprep.mubr.bf16.mxu0 0
    %193 = vmatmul.mubr.bf16.gmra.mxu0 %v158
    %v194 = vpop.f32.mrf.mxu0
    %v195 = vadd.f32 %v144, %v194
    %v196 = vpop.f32.mrf.mxu0
    %v197 = vpop.f32.mrf.mxu0
    %v198 = vadd.f32 %v144, %v197
    %v199 = vpop.f32.mrf.mxu0
    %200 = vdwg.mxu0
    %v201 = vpack.c.bf16 %v198, %v195
    %v202 = vld [vmem:[#allocation6] sm:$0x1]
    %v204 = vlaneseq
    %v205 = vshrl.u32 %v204, 7
    %v206 = vsub.s32 0, %v205
    %v207 = vrot.slane %v202, %v206
    %210 = vrot.lane.b32.xlu0 %v201, 96
    %v211 = vpop.permute.xlu0 %210
    %vm212 = vcmask 130048
    %v214 = vsel %vm212, %v201, 0
    %v217 = vsel %vm212, %v211, 0
    %219 = vmatprep.subr.bf16.mxu0 0
    %220 = vmatpush1.bf16.xpose.msra.mxu0 0
    %221 = vmatprep.subr.bf16.mxu0 0
    %222 = vmatpush1.bf16.xpose.msra.mxu0 0
    %223 = vmatprep.subr.bf16.mxu0 0
    %224 = vmatpush1.bf16.xpose.msra.mxu0 0
    %225 = vmatprep.subr.bf16.mxu0 0
    %226 = vmatpush1.bf16.xpose.msra.mxu0 0
    %227 = vmatprep.subr.bf16.mxu0 0
    %228 = vmatpush1.bf16.xpose.msra.mxu0 0
    %229 = vmatprep.subr.bf16.mxu0 0
    %230 = vmatpush1.bf16.xpose.msra.mxu0 0
    %231 = vmatprep.subr.bf16.mxu0 0
    %232 = vmatpush1.bf16.xpose.msra.mxu0 0
    %233 = vmatprep.subr.bf16.mxu0 0
    %234 = vmatpush1.bf16.xpose.msra.mxu0 %v217
    %235 = vmatprep.subr.bf16.mxu0 0
    %236 = vmatpush2.bf16.xpose.msra.mxu0 0
    %237 = vmatprep.subr.bf16.mxu0 0
    %238 = vmatpush2.bf16.xpose.msra.mxu0 0
    %239 = vmatprep.subr.bf16.mxu0 0
    %240 = vmatpush2.bf16.xpose.msra.mxu0 0
    %241 = vmatprep.subr.bf16.mxu0 0
    %242 = vmatpush2.bf16.xpose.msra.mxu0 0
    %243 = vmatprep.subr.bf16.mxu0 0
    %244 = vmatpush2.bf16.xpose.msra.mxu0 0
    %245 = vmatprep.subr.bf16.mxu0 0
    %246 = vmatpush2.bf16.xpose.msra.mxu0 0
    %247 = vmatprep.subr.bf16.mxu0 0
    %248 = vmatpush2.bf16.xpose.msra.mxu0 0
    %249 = vmatprep.subr.bf16.mxu0 0
    %250 = vmatpush2.bf16.xpose.msra.mxu0 0
    %251 = vmatprep.mubr.bf16.mxu0 0
    %252 = vmatmul.mubr.bf16.gmra.mxu0 %v214
    %v253 = vpop.f32.mrf.mxu0
    %v254 = vadd.f32 %v207, %v253
    %v255 = vpop.f32.mrf.mxu0
    %v256 = vpop.f32.mrf.mxu0
    %v257 = vpop.f32.mrf.mxu0
    %258 = vdwg.mxu0
    %vm259 = vcmask 64512
    %v260 = vsel %vm259, %v254, -inf
    %261 = vmax.xlane.f32.xlu0 %v260
    %v262 = vpop.xlane.xlu0 %261
    %v263 = vsub.f32 %v254, %v262
    %v264 = vmul.f32 %v263, 1.442695
    %v265 = vpow.pop %v264
    %v266 = vsel %vm259, %v265, 0.0
    %267 = vadd.xlane.f32.xlu0 %v266
    %v268 = vpop.xlane.xlu0 %267
    %v269 = vrcp.pop %v268
    %v270 = vmul.f32 %v265, %v269
    %v271 = vpack.c.bf16 %v270, %v270
    %272 = vrot.lane.b32.xlu0 %v201, 64
    %v273 = vpop.permute.xlu0 %272
    %v275 = vsel %vm259, %v271, 0
    %vm277 = vcmask 1043456
    %v279 = vsel %vm277, %v273, 0
    %281 = vmatprep.subr.bf16.mxu0 0
    %282 = vmatpush1.bf16.msra.mxu0 0
    %283 = vmatprep.subr.bf16.mxu0 0
    %284 = vmatpush1.bf16.msra.mxu0 0
    %285 = vmatprep.subr.bf16.mxu0 0
    %286 = vmatpush1.bf16.msra.mxu0 0
    %287 = vmatprep.subr.bf16.mxu0 0
    %288 = vmatpush1.bf16.msra.mxu0 0
    %289 = vmatprep.subr.bf16.mxu0 0
    %290 = vmatpush1.bf16.msra.mxu0 0
    %291 = vmatprep.subr.bf16.mxu0 0
    %292 = vmatpush1.bf16.msra.mxu0 0
    %293 = vmatprep.subr.bf16.mxu0 0
    %294 = vmatpush1.bf16.msra.mxu0 0
    %295 = vmatprep.subr.bf16.mxu0 0
    %296 = vmatpush1.bf16.msra.mxu0 %v279
    %297 = vmatprep.subr.bf16.mxu0 0
    %298 = vmatpush2.bf16.msra.mxu0 0
    %299 = vmatprep.subr.bf16.mxu0 0
    %300 = vmatpush2.bf16.msra.mxu0 0
    %301 = vmatprep.subr.bf16.mxu0 0
    %302 = vmatpush2.bf16.msra.mxu0 0
    %303 = vmatprep.subr.bf16.mxu0 0
    %304 = vmatpush2.bf16.msra.mxu0 0
    %305 = vmatprep.subr.bf16.mxu0 0
    %306 = vmatpush2.bf16.msra.mxu0 0
    %307 = vmatprep.subr.bf16.mxu0 0
    %308 = vmatpush2.bf16.msra.mxu0 0
    %309 = vmatprep.subr.bf16.mxu0 0
    %310 = vmatpush2.bf16.msra.mxu0 0
    %311 = vmatprep.subr.bf16.mxu0 0
    %312 = vmatpush2.bf16.msra.mxu0 0
    %313 = vmatprep.mubr.bf16.mxu0 0
    %314 = vmatmul.mubr.bf16.gmra.mxu0 %v275
    %v315 = vpop.f32.mrf.mxu0
    %v316 = vadd.f32 0.0, %v315
    %v317 = vpop.f32.mrf.mxu0
    %v318 = vpop.f32.mrf.mxu0
    %v319 = vpop.f32.mrf.mxu0
    %320 = vdwg.mxu0
    %v321 = vpack.c.bf16 %v316, %v316
    %vm322 = vcmask 125952
    %323 = vst.msk [vmem:[#allocation2] sm:$0xf] %vm322, %v321
    %324 = vrot.lane.b32.xlu0 %v201, 112
    %v325 = vpop.permute.xlu0 %324
    %326 = vrot.lane.b32.xlu0 %v201, 80
    %v327 = vpop.permute.xlu0 %326
    %v329 = vsel %vm212, %v325, 0
    %v332 = vsel %vm212, %v327, 0
    %334 = vmatprep.subr.bf16.mxu0 0
    %335 = vmatpush1.bf16.xpose.msra.mxu0 0
    %336 = vmatprep.subr.bf16.mxu0 0
    %337 = vmatpush1.bf16.xpose.msra.mxu0 0
    %338 = vmatprep.subr.bf16.mxu0 0
    %339 = vmatpush1.bf16.xpose.msra.mxu0 0
    %340 = vmatprep.subr.bf16.mxu0 0
    %341 = vmatpush1.bf16.xpose.msra.mxu0 0
    %342 = vmatprep.subr.bf16.mxu0 0
    %343 = vmatpush1.bf16.xpose.msra.mxu0 0
    %344 = vmatprep.subr.bf16.mxu0 0
    %345 = vmatpush1.bf16.xpose.msra.mxu0 0
    %346 = vmatprep.subr.bf16.mxu0 0
    %347 = vmatpush1.bf16.xpose.msra.mxu0 0
    %348 = vmatprep.subr.bf16.mxu0 0
    %349 = vmatpush1.bf16.xpose.msra.mxu0 %v332
    %350 = vmatprep.subr.bf16.mxu0 0
    %351 = vmatpush2.bf16.xpose.msra.mxu0 0
    %352 = vmatprep.subr.bf16.mxu0 0
    %353 = vmatpush2.bf16.xpose.msra.mxu0 0
    %354 = vmatprep.subr.bf16.mxu0 0
    %355 = vmatpush2.bf16.xpose.msra.mxu0 0
    %356 = vmatprep.subr.bf16.mxu0 0
    %357 = vmatpush2.bf16.xpose.msra.mxu0 0
    %358 = vmatprep.subr.bf16.mxu0 0
    %359 = vmatpush2.bf16.xpose.msra.mxu0 0
    %360 = vmatprep.subr.bf16.mxu0 0
    %361 = vmatpush2.bf16.xpose.msra.mxu0 0
    %362 = vmatprep.subr.bf16.mxu0 0
    %363 = vmatpush2.bf16.xpose.msra.mxu0 0
    %364 = vmatprep.subr.bf16.mxu0 0
    %365 = vmatpush2.bf16.xpose.msra.mxu0 0
    %366 = vmatprep.mubr.bf16.mxu0 0
    %367 = vmatmul.mubr.bf16.gmra.mxu0 %v329
    %v368 = vpop.f32.mrf.mxu0
    %v369 = vadd.f32 %v207, %v368
    %v370 = vpop.f32.mrf.mxu0
    %v371 = vpop.f32.mrf.mxu0
    %v372 = vpop.f32.mrf.mxu0
    %373 = vdwg.mxu0
    %v374 = vsel %vm259, %v369, -inf
    %375 = vmax.xlane.f32.xlu0 %v374
    %v376 = vpop.xlane.xlu0 %375
    %v377 = vsub.f32 %v369, %v376
    %v378 = vmul.f32 %v377, 1.442695
    %v379 = vpow.pop %v378
    %v380 = vsel %vm259, %v379, 0.0
    %381 = vadd.xlane.f32.xlu0 %v380
    %v382 = vpop.xlane.xlu0 %381
    %v383 = vrcp.pop %v382
    %v384 = vmul.f32 %v379, %v383
    %v385 = vpack.c.bf16 %v384, %v384
    %386 = vrot.lane.b32.xlu0 %v201, 48
    %v387 = vpop.permute.xlu0 %386
    %v389 = vsel %vm259, %v385, 0
    %v392 = vsel %vm277, %v387, 0
    %394 = vmatprep.subr.bf16.mxu0 0
    %395 = vmatpush1.bf16.msra.mxu0 0
    %396 = vmatprep.subr.bf16.mxu0 0
    %397 = vmatpush1.bf16.msra.mxu0 0
    %398 = vmatprep.subr.bf16.mxu0 0
    %399 = vmatpush1.bf16.msra.mxu0 0
    %400 = vmatprep.subr.bf16.mxu0 0
    %401 = vmatpush1.bf16.msra.mxu0 0
    %402 = vmatprep.subr.bf16.mxu0 0
    %403 = vmatpush1.bf16.msra.mxu0 0
    %404 = vmatprep.subr.bf16.mxu0 0
    %405 = vmatpush1.bf16.msra.mxu0 0
    %406 = vmatprep.subr.bf16.mxu0 0
    %407 = vmatpush1.bf16.msra.mxu0 0
    %408 = vmatprep.subr.bf16.mxu0 0
    %409 = vmatpush1.bf16.msra.mxu0 %v392
    %410 = vmatprep.subr.bf16.mxu0 0
    %411 = vmatpush2.bf16.msra.mxu0 0
    %412 = vmatprep.subr.bf16.mxu0 0
    %413 = vmatpush2.bf16.msra.mxu0 0
    %414 = vmatprep.subr.bf16.mxu0 0
    %415 = vmatpush2.bf16.msra.mxu0 0
    %416 = vmatprep.subr.bf16.mxu0 0
    %417 = vmatpush2.bf16.msra.mxu0 0
    %418 = vmatprep.subr.bf16.mxu0 0
    %419 = vmatpush2.bf16.msra.mxu0 0
    %420 = vmatprep.subr.bf16.mxu0 0
    %421 = vmatpush2.bf16.msra.mxu0 0
    %422 = vmatprep.subr.bf16.mxu0 0
    %423 = vmatpush2.bf16.msra.mxu0 0
    %424 = vmatprep.subr.bf16.mxu0 0
    %425 = vmatpush2.bf16.msra.mxu0 0
    %426 = vmatprep.mubr.bf16.mxu0 0
    %427 = vmatmul.mubr.bf16.gmra.mxu0 %v389
    %v428 = vpop.f32.mrf.mxu0
    %v429 = vadd.f32 0.0, %v428
    %v430 = vpop.f32.mrf.mxu0
    %v431 = vpop.f32.mrf.mxu0
    %v432 = vpop.f32.mrf.mxu0
    %433 = vdwg.mxu0
    %v434 = vpack.c.bf16 %v429, %v429
    %v436 = vunpack.c.l.b16 %v434
    %v437 = vpack.c.b16 %v436, %v436
    %438 = vrot.lane.b32.xlu0 %v437, 16
    %v439 = vpop.permute.xlu0 %438
    %vm441 = vcmask 257152
    %442 = vst.msk [vmem:[#allocation2] sm:$0xf] %vm441, %v439
    %s443 = scalar_lea.vmem [#allocation6], 1
    %v444 = vld [vmem:[%s443] sm:$0x1]
    %v446 = vlaneseq
    %v447 = vshrl.u32 %v446, 7
    %v448 = vsub.s32 0, %v447
    %v449 = vrot.slane %v444, %v448
    %v451 = vrot.slane %v201, 4
    %452 = vrot.lane.b32.xlu0 %v451, 96
    %v453 = vpop.permute.xlu0 %452
    %v455 = vsel %vm212, %v451, 0
    %v458 = vsel %vm212, %v453, 0
    %460 = vmatprep.subr.bf16.mxu0 0
    %461 = vmatpush1.bf16.xpose.msra.mxu0 0
    %462 = vmatprep.subr.bf16.mxu0 0
    %463 = vmatpush1.bf16.xpose.msra.mxu0 0
    %464 = vmatprep.subr.bf16.mxu0 0
    %465 = vmatpush1.bf16.xpose.msra.mxu0 0
    %466 = vmatprep.subr.bf16.mxu0 0
    %467 = vmatpush1.bf16.xpose.msra.mxu0 0
    %468 = vmatprep.subr.bf16.mxu0 0
    %469 = vmatpush1.bf16.xpose.msra.mxu0 0
    %470 = vmatprep.subr.bf16.mxu0 0
    %471 = vmatpush1.bf16.xpose.msra.mxu0 0
    %472 = vmatprep.subr.bf16.mxu0 0
    %473 = vmatpush1.bf16.xpose.msra.mxu0 0
    %474 = vmatprep.subr.bf16.mxu0 0
    %475 = vmatpush1.bf16.xpose.msra.mxu0 %v458
    %476 = vmatprep.subr.bf16.mxu0 0
    %477 = vmatpush2.bf16.xpose.msra.mxu0 0
    %478 = vmatprep.subr.bf16.mxu0 0
    %479 = vmatpush2.bf16.xpose.msra.mxu0 0
    %480 = vmatprep.subr.bf16.mxu0 0
    %481 = vmatpush2.bf16.xpose.msra.mxu0 0
    %482 = vmatprep.subr.bf16.mxu0 0
    %483 = vmatpush2.bf16.xpose.msra.mxu0 0
    %484 = vmatprep.subr.bf16.mxu0 0
    %485 = vmatpush2.bf16.xpose.msra.mxu0 0
    %486 = vmatprep.subr.bf16.mxu0 0
    %487 = vmatpush2.bf16.xpose.msra.mxu0 0
    %488 = vmatprep.subr.bf16.mxu0 0
    %489 = vmatpush2.bf16.xpose.msra.mxu0 0
    %490 = vmatprep.subr.bf16.mxu0 0
    %491 = vmatpush2.bf16.xpose.msra.mxu0 0
    %492 = vmatprep.mubr.bf16.mxu0 0
    %493 = vmatmul.mubr.bf16.gmra.mxu0 %v455
    %v494 = vpop.f32.mrf.mxu0
    %v495 = vadd.f32 %v449, %v494
    %v496 = vpop.f32.mrf.mxu0
    %v497 = vpop.f32.mrf.mxu0
    %v498 = vpop.f32.mrf.mxu0
    %499 = vdwg.mxu0
    %v500 = vsel %vm259, %v495, -inf
    %501 = vmax.xlane.f32.xlu0 %v500
    %v502 = vpop.xlane.xlu0 %501
    %v503 = vsub.f32 %v495, %v502
    %v504 = vmul.f32 %v503, 1.442695
    %v505 = vpow.pop %v504
    %v506 = vsel %vm259, %v505, 0.0
    %507 = vadd.xlane.f32.xlu0 %v506
    %v508 = vpop.xlane.xlu0 %507
    %v509 = vrcp.pop %v508
    %v510 = vmul.f32 %v505, %v509
    %v511 = vpack.c.bf16 %v510, %v510
    %512 = vrot.lane.b32.xlu0 %v451, 64
    %v513 = vpop.permute.xlu0 %512
    %v515 = vsel %vm259, %v511, 0
    %v518 = vsel %vm277, %v513, 0
    %520 = vmatprep.subr.bf16.mxu0 0
    %521 = vmatpush1.bf16.msra.mxu0 0
    %522 = vmatprep.subr.bf16.mxu0 0
    %523 = vmatpush1.bf16.msra.mxu0 0
    %524 = vmatprep.subr.bf16.mxu0 0
    %525 = vmatpush1.bf16.msra.mxu0 0
    %526 = vmatprep.subr.bf16.mxu0 0
    %527 = vmatpush1.bf16.msra.mxu0 0
    %528 = vmatprep.subr.bf16.mxu0 0
    %529 = vmatpush1.bf16.msra.mxu0 0
    %530 = vmatprep.subr.bf16.mxu0 0
    %531 = vmatpush1.bf16.msra.mxu0 0
    %532 = vmatprep.subr.bf16.mxu0 0
    %533 = vmatpush1.bf16.msra.mxu0 0
    %534 = vmatprep.subr.bf16.mxu0 0
    %535 = vmatpush1.bf16.msra.mxu0 %v518
    %536 = vmatprep.subr.bf16.mxu0 0
    %537 = vmatpush2.bf16.msra.mxu0 0
    %538 = vmatprep.subr.bf16.mxu0 0
    %539 = vmatpush2.bf16.msra.mxu0 0
    %540 = vmatprep.subr.bf16.mxu0 0
    %541 = vmatpush2.bf16.msra.mxu0 0
    %542 = vmatprep.subr.bf16.mxu0 0
    %543 = vmatpush2.bf16.msra.mxu0 0
    %544 = vmatprep.subr.bf16.mxu0 0
    %545 = vmatpush2.bf16.msra.mxu0 0
    %546 = vmatprep.subr.bf16.mxu0 0
    %547 = vmatpush2.bf16.msra.mxu0 0
    %548 = vmatprep.subr.bf16.mxu0 0
    %549 = vmatpush2.bf16.msra.mxu0 0
    %550 = vmatprep.subr.bf16.mxu0 0
    %551 = vmatpush2.bf16.msra.mxu0 0
    %552 = vmatprep.mubr.bf16.mxu0 0
    %553 = vmatmul.mubr.bf16.gmra.mxu0 %v515
    %v554 = vpop.f32.mrf.mxu0
    %v555 = vadd.f32 0.0, %v554
    %v556 = vpop.f32.mrf.mxu0
    %v557 = vpop.f32.mrf.mxu0
    %v558 = vpop.f32.mrf.mxu0
    %559 = vdwg.mxu0
    %v560 = vpack.c.bf16 %v555, %v555
    %561 = vst.msk [vmem:[#allocation2 + $0x4] sm:$0xf] %vm322, %v560
    %562 = vrot.lane.b32.xlu0 %v451, 112
    %v563 = vpop.permute.xlu0 %562
    %564 = vrot.lane.b32.xlu0 %v451, 80
    %v565 = vpop.permute.xlu0 %564
    %v567 = vsel %vm212, %v563, 0
    %v570 = vsel %vm212, %v565, 0
    %572 = vmatprep.subr.bf16.mxu0 0
    %573 = vmatpush1.bf16.xpose.msra.mxu0 0
    %574 = vmatprep.subr.bf16.mxu0 0
    %575 = vmatpush1.bf16.xpose.msra.mxu0 0
    %576 = vmatprep.subr.bf16.mxu0 0
    %577 = vmatpush1.bf16.xpose.msra.mxu0 0
    %578 = vmatprep.subr.bf16.mxu0 0
    %579 = vmatpush1.bf16.xpose.msra.mxu0 0
    %580 = vmatprep.subr.bf16.mxu0 0
    %581 = vmatpush1.bf16.xpose.msra.mxu0 0
    %582 = vmatprep.subr.bf16.mxu0 0
    %583 = vmatpush1.bf16.xpose.msra.mxu0 0
    %584 = vmatprep.subr.bf16.mxu0 0
    %585 = vmatpush1.bf16.xpose.msra.mxu0 0
    %586 = vmatprep.subr.bf16.mxu0 0
    %587 = vmatpush1.bf16.xpose.msra.mxu0 %v570
    %588 = vmatprep.subr.bf16.mxu0 0
    %589 = vmatpush2.bf16.xpose.msra.mxu0 0
    %590 = vmatprep.subr.bf16.mxu0 0
    %591 = vmatpush2.bf16.xpose.msra.mxu0 0
    %592 = vmatprep.subr.bf16.mxu0 0
    %593 = vmatpush2.bf16.xpose.msra.mxu0 0
    %594 = vmatprep.subr.bf16.mxu0 0
    %595 = vmatpush2.bf16.xpose.msra.mxu0 0
    %596 = vmatprep.subr.bf16.mxu0 0
    %597 = vmatpush2.bf16.xpose.msra.mxu0 0
    %598 = vmatprep.subr.bf16.mxu0 0
    %599 = vmatpush2.bf16.xpose.msra.mxu0 0
    %600 = vmatprep.subr.bf16.mxu0 0
    %601 = vmatpush2.bf16.xpose.msra.mxu0 0
    %602 = vmatprep.subr.bf16.mxu0 0
    %603 = vmatpush2.bf16.xpose.msra.mxu0 0
    %604 = vmatprep.mubr.bf16.mxu0 0
    %605 = vmatmul.mubr.bf16.gmra.mxu0 %v567
    %v606 = vpop.f32.mrf.mxu0
    %v607 = vadd.f32 %v449, %v606
    %v608 = vpop.f32.mrf.mxu0
    %v609 = vpop.f32.mrf.mxu0
    %v610 = vpop.f32.mrf.mxu0
    %611 = vdwg.mxu0
    %v612 = vsel %vm259, %v607, -inf
    %613 = vmax.xlane.f32.xlu0 %v612
    %v614 = vpop.xlane.xlu0 %613
    %v615 = vsub.f32 %v607, %v614
    %v616 = vmul.f32 %v615, 1.442695
    %v617 = vpow.pop %v616
    %v618 = vsel %vm259, %v617, 0.0
    %619 = vadd.xlane.f32.xlu0 %v618
    %v620 = vpop.xlane.xlu0 %619
    %v621 = vrcp.pop %v620
    %v622 = vmul.f32 %v617, %v621
    %v623 = vpack.c.bf16 %v622, %v622
    %624 = vrot.lane.b32.xlu0 %v451, 48
    %v625 = vpop.permute.xlu0 %624
    %v627 = vsel %vm259, %v623, 0
    %v630 = vsel %vm277, %v625, 0
    %632 = vmatprep.subr.bf16.mxu0 0
    %633 = vmatpush1.bf16.msra.mxu0 0
    %634 = vmatprep.subr.bf16.mxu0 0
    %635 = vmatpush1.bf16.msra.mxu0 0
    %636 = vmatprep.subr.bf16.mxu0 0
    %637 = vmatpush1.bf16.msra.mxu0 0
    %638 = vmatprep.subr.bf16.mxu0 0
    %639 = vmatpush1.bf16.msra.mxu0 0
    %640 = vmatprep.subr.bf16.mxu0 0
    %641 = vmatpush1.bf16.msra.mxu0 0
    %642 = vmatprep.subr.bf16.mxu0 0
    %643 = vmatpush1.bf16.msra.mxu0 0
    %644 = vmatprep.subr.bf16.mxu0 0
    %645 = vmatpush1.bf16.msra.mxu0 0
    %646 = vmatprep.subr.bf16.mxu0 0
    %647 = vmatpush1.bf16.msra.mxu0 %v630
    %648 = vmatprep.subr.bf16.mxu0 0
    %649 = vmatpush2.bf16.msra.mxu0 0
    %650 = vmatprep.subr.bf16.mxu0 0
    %651 = vmatpush2.bf16.msra.mxu0 0
    %652 = vmatprep.subr.bf16.mxu0 0
    %653 = vmatpush2.bf16.msra.mxu0 0
    %654 = vmatprep.subr.bf16.mxu0 0
    %655 = vmatpush2.bf16.msra.mxu0 0
    %656 = vmatprep.subr.bf16.mxu0 0
    %657 = vmatpush2.bf16.msra.mxu0 0
    %658 = vmatprep.subr.bf16.mxu0 0
    %659 = vmatpush2.bf16.msra.mxu0 0
    %660 = vmatprep.subr.bf16.mxu0 0
    %661 = vmatpush2.bf16.msra.mxu0 0
    %662 = vmatprep.subr.bf16.mxu0 0
    %663 = vmatpush2.bf16.msra.mxu0 0
    %664 = vmatprep.mubr.bf16.mxu0 0
    %665 = vmatmul.mubr.bf16.gmra.mxu0 %v627
    %v666 = vpop.f32.mrf.mxu0
    %v667 = vadd.f32 0.0, %v666
    %v668 = vpop.f32.mrf.mxu0
    %v669 = vpop.f32.mrf.mxu0
    %v670 = vpop.f32.mrf.mxu0
    %671 = vdwg.mxu0
    %v672 = vpack.c.bf16 %v667, %v667
    %v674 = vunpack.c.l.b16 %v672
    %v675 = vpack.c.b16 %v674, %v674
    %676 = vrot.lane.b32.xlu0 %v675, 16
    %v677 = vpop.permute.xlu0 %676
    %679 = vst.msk [vmem:[#allocation2 + $0x4] sm:$0xf] %vm441, %v677
    %v680 = vld [vmem:[#allocation2] sm:$0xf]
    %v681 = vld [vmem:[#allocation2 + $0x4] sm:$0xf]
    %v682 = vlaneseq
    %v683 = vshrl.u32 %v682, 7
    %v684 = vsub.s32 0, %v683
    %v685 = vrot.slane %v95, %v684
    %v688 = vunpack.c.l.b16 %v680
    %v689 = vunpack.c.l.b16 %v681
    %v690 = vpack.c.b16 %v689, %v688
    %691 = vrot.lane.b32.xlu0 %v153, 32
    %v692 = vpop.permute.xlu0 %691
    %693 = vrot.lane.b32.xlu0 %v154, 32
    %v694 = vpop.permute.xlu0 %693
    %v698 = vsel %vm100, %v690, 0
    %700 = vmatprep.subr.bf16.mxu0 0
    %701 = vmatpush1.bf16.msra.mxu0 0
    %702 = vmatprep.subr.bf16.mxu0 0
    %703 = vmatpush1.bf16.msra.mxu0 0
    %704 = vmatprep.subr.bf16.mxu0 0
    %705 = vmatpush1.bf16.msra.mxu0 0
    %706 = vmatprep.subr.bf16.mxu0 0
    %707 = vmatpush1.bf16.msra.mxu0 0
    %708 = vmatprep.subr.bf16.mxu0 0
    %709 = vmatpush1.bf16.msra.mxu0 0
    %710 = vmatprep.subr.bf16.mxu0 0
    %711 = vmatpush1.bf16.msra.mxu0 0
    %712 = vmatprep.subr.bf16.mxu0 0
    %713 = vmatpush1.bf16.msra.mxu0 %v694
    %714 = vmatprep.subr.bf16.mxu0 0
    %715 = vmatpush1.bf16.msra.mxu0 %v692
    %716 = vmatprep.subr.bf16.mxu0 0
    %717 = vmatpush2.bf16.msra.mxu0 0
    %718 = vmatprep.subr.bf16.mxu0 0
    %719 = vmatpush2.bf16.msra.mxu0 0
    %720 = vmatprep.subr.bf16.mxu0 0
    %721 = vmatpush2.bf16.msra.mxu0 0
    %722 = vmatprep.subr.bf16.mxu0 0
    %723 = vmatpush2.bf16.msra.mxu0 0
    %724 = vmatprep.subr.bf16.mxu0 0
    %725 = vmatpush2.bf16.msra.mxu0 0
    %726 = vmatprep.subr.bf16.mxu0 0
    %727 = vmatpush2.bf16.msra.mxu0 0
    %728 = vmatprep.subr.bf16.mxu0 0
    %729 = vmatpush2.bf16.msra.mxu0 0
    %730 = vmatprep.subr.bf16.mxu0 0
    %731 = vmatpush2.bf16.msra.mxu0 0
    %732 = vmatprep.mubr.bf16.mxu0 0
    %733 = vmatmul.mubr.bf16.gmra.mxu0 %v698
    %v734 = vpop.f32.mrf.mxu0
    %v735 = vadd.f32 %v685, %v734
    %v736 = vpop.f32.mrf.mxu0
    %v737 = vpop.f32.mrf.mxu0
    %v738 = vadd.f32 %v685, %v737
    %v739 = vpop.f32.mrf.mxu0
    %740 = vdwg.mxu0
    %v741 = vadd.f32 %v74, %v735
    %v742 = vadd.f32 %v75, %v738
    %v743 = vsel %vm100, %v741, 0.0
    %744 = vadd.xlane.f32.xlu0 %v743
    %v745 = vpop.xlane.xlu0 %744
    %v746 = vsel %vm100, %v742, 0.0
    %747 = vadd.xlane.f32.xlu0 %v746
    %v748 = vpop.xlane.xlu0 %747
    %v749 = vmul.f32 %v745, %v107
    %v750 = vmul.f32 %v748, %v107
    %v751 = vsub.f32 %v741, %v749
    %v752 = vsub.f32 %v742, %v750
    %v753 = vmul.f32 %v751, %v751
    %v754 = vmul.f32 %v752, %v752
    %v755 = vsel %vm100, %v753, 0.0
    %756 = vadd.xlane.f32.xlu0 %v755
    %v757 = vpop.xlane.xlu0 %756
    %v758 = vsel %vm100, %v754, 0.0
    %759 = vadd.xlane.f32.xlu0 %v758
    %v760 = vpop.xlane.xlu0 %759
    %v761 = vmul.f32 %v757, %v107
    %v762 = vmul.f32 %v760, %v107
    %v763 = vadd.f32 %v761, 1e-05
    %v764 = vadd.f32 %v762, 1e-05
    %v765 = vrsqrt.pop %v763
    %v766 = vrsqrt.pop %v764
    %v767 = vmul.f32 %v751, %v765
    %v768 = vmul.f32 %v752, %v766
    %v769 = vlaneseq
    %v770 = vshrl.u32 %v769, 7
    %v771 = vsub.s32 0, %v770
    %v772 = vrot.slane %v96, %v771
    %v773 = vmul.f32 %v767, %v772
    %v774 = vmul.f32 %v768, %v772
    %v775 = vlaneseq
    %v776 = vshrl.u32 %v775, 7
    %v777 = vsub.s32 0, %v776
    %v778 = vrot.slane %v97, %v777
    %v779 = vadd.f32 %v773, %v778
    %v780 = vadd.f32 %v774, %v778
    %v781 = vpack.c.bf16 %v780, %v779
    %v782 = vlaneseq
    %v783 = vshrl.u32 %v782, 7
    %v784 = vsub.s32 0, %v783
    %v785 = vrot.slane %v98, %v784
    %v790 = vunpack.c.l.b16 %v80
    %v791 = vunpack.c.l.b16 %v81
    %v792 = vunpack.c.l.b16 %v82
    %v793 = vunpack.c.l.b16 %v83
    %v794 = vpack.c.b16 %v791, %v790
    %v795 = vpack.c.b16 %v793, %v792
    %v799 = vsel %vm100, %v781, 0
    %801 = vmatprep.subr.bf16.mxu0 0
    %802 = vmatpush1.bf16.msra.mxu0 0
    %803 = vmatprep.subr.bf16.mxu0 0
    %804 = vmatpush1.bf16.msra.mxu0 0
    %805 = vmatprep.subr.bf16.mxu0 0
    %806 = vmatpush1.bf16.msra.mxu0 0
    %807 = vmatprep.subr.bf16.mxu0 0
    %808 = vmatpush1.bf16.msra.mxu0 0
    %809 = vmatprep.subr.bf16.mxu0 0
    %810 = vmatpush1.bf16.msra.mxu0 0
    %811 = vmatprep.subr.bf16.mxu0 0
    %812 = vmatpush1.bf16.msra.mxu0 0
    %813 = vmatprep.subr.bf16.mxu0 0
    %814 = vmatpush1.bf16.msra.mxu0 %v795
    %815 = vmatprep.subr.bf16.mxu0 0
    %816 = vmatpush1.bf16.msra.mxu0 %v794
    %817 = vmatprep.subr.bf16.mxu0 0
    %818 = vmatpush2.bf16.msra.mxu0 0
    %819 = vmatprep.subr.bf16.mxu0 0
    %820 = vmatpush2.bf16.msra.mxu0 0
    %821 = vmatprep.subr.bf16.mxu0 0
    %822 = vmatpush2.bf16.msra.mxu0 0
    %823 = vmatprep.subr.bf16.mxu0 0
    %824 = vmatpush2.bf16.msra.mxu0 0
    %825 = vmatprep.subr.bf16.mxu0 0
    %826 = vmatpush2.bf16.msra.mxu0 0
    %827 = vmatprep.subr.bf16.mxu0 0
    %828 = vmatpush2.bf16.msra.mxu0 0
    %829 = vmatprep.subr.bf16.mxu0 0
    %830 = vmatpush2.bf16.msra.mxu0 0
    %831 = vmatprep.subr.bf16.mxu0 0
    %832 = vmatpush2.bf16.msra.mxu0 0
    %833 = vmatprep.mubr.bf16.mxu0 0
    %834 = vmatmul.mubr.bf16.gmra.mxu0 %v799
    %v835 = vpop.f32.mrf.mxu0
    %v836 = vadd.f32 %v785, %v835
    %v837 = vpop.f32.mrf.mxu0
    %v838 = vpop.f32.mrf.mxu0
    %v839 = vadd.f32 %v785, %v838
    %v840 = vpop.f32.mrf.mxu0
    %841 = vdwg.mxu0
    %v842 = vmul.f32 %v836, 1.702
    %v843 = vmul.f32 %v839, 1.702
    %v844 = vxor.u32 %v842, 2147483648
    %v845 = vxor.u32 %v843, 2147483648
    %v846 = vmul.f32 %v844, 1.442695
    %v847 = vpow.pop %v846
    %v848 = vmul.f32 %v845, 1.442695
    %v849 = vpow.pop %v848
    %v850 = vadd.f32 %v847, 1.0
    %v851 = vadd.f32 %v849, 1.0
    %v852 = vrcp.pop %v850
    %v853 = vmul.f32 1.0, %v852
    %v854 = vrcp.pop %v851
    %v855 = vmul.f32 1.0, %v854
    %v856 = vmul.f32 %v836, %v853
    %v857 = vmul.f32 %v839, %v855
    %v858 = vpack.c.bf16 %v857, %v856
    %v859 = vlaneseq
    %v860 = vshrl.u32 %v859, 7
    %v861 = vsub.s32 0, %v860
    %v862 = vrot.slane %v99, %v861
    %v871 = vunpack.c.l.b16 %v84
    %v872 = vunpack.c.l.b16 %v85
    %v873 = vunpack.c.l.b16 %v86
    %v874 = vunpack.c.l.b16 %v87
    %v875 = vunpack.c.l.b16 %v88
    %v876 = vunpack.c.l.b16 %v89
    %v877 = vunpack.c.l.b16 %v90
    %v878 = vunpack.c.l.b16 %v91
    %v879 = vpack.c.b16 %v872, %v871
    %v880 = vpack.c.b16 %v874, %v873
    %v881 = vpack.c.b16 %v876, %v875
    %v882 = vpack.c.b16 %v878, %v877
    %vm887 = vcmask 523264
    %v889 = vsel %vm887, %v858, 0
    %891 = vmatprep.subr.bf16.mxu0 0
    %892 = vmatpush1.bf16.msra.mxu0 0
    %893 = vmatprep.subr.bf16.mxu0 0
    %894 = vmatpush1.bf16.msra.mxu0 0
    %895 = vmatprep.subr.bf16.mxu0 0
    %896 = vmatpush1.bf16.msra.mxu0 0
    %897 = vmatprep.subr.bf16.mxu0 0
    %898 = vmatpush1.bf16.msra.mxu0 0
    %899 = vmatprep.subr.bf16.mxu0 0
    %900 = vmatpush1.bf16.msra.mxu0 %v882
    %901 = vmatprep.subr.bf16.mxu0 0
    %902 = vmatpush1.bf16.msra.mxu0 %v881
    %903 = vmatprep.subr.bf16.mxu0 0
    %904 = vmatpush1.bf16.msra.mxu0 %v880
    %905 = vmatprep.subr.bf16.mxu0 0
    %906 = vmatpush1.bf16.msra.mxu0 %v879
    %907 = vmatprep.subr.bf16.mxu0 0
    %908 = vmatpush2.bf16.msra.mxu0 0
    %909 = vmatprep.subr.bf16.mxu0 0
    %910 = vmatpush2.bf16.msra.mxu0 0
    %911 = vmatprep.subr.bf16.mxu0 0
    %912 = vmatpush2.bf16.msra.mxu0 0
    %913 = vmatprep.subr.bf16.mxu0 0
    %914 = vmatpush2.bf16.msra.mxu0 0
    %915 = vmatprep.subr.bf16.mxu0 0
    %916 = vmatpush2.bf16.msra.mxu0 0
    %917 = vmatprep.subr.bf16.mxu0 0
    %918 = vmatpush2.bf16.msra.mxu0 0
    %919 = vmatprep.subr.bf16.mxu0 0
    %920 = vmatpush2.bf16.msra.mxu0 0
    %921 = vmatprep.subr.bf16.mxu0 0
    %922 = vmatpush2.bf16.msra.mxu0 0
    %923 = vmatprep.mubr.bf16.mxu0 0
    %924 = vmatmul.mubr.bf16.gmra.mxu0 %v889
    %v925 = vpop.f32.mrf.mxu0
    %v926 = vadd.f32 %v862, %v925
    %v927 = vpop.f32.mrf.mxu0
    %v928 = vpop.f32.mrf.mxu0
    %v929 = vadd.f32 %v862, %v928
    %v930 = vpop.f32.mrf.mxu0
    %931 = vdwg.mxu0
    %v932 = vadd.f32 %v741, %v926
    %v933 = vadd.f32 %v742, %v929
    %s934 = scalar_lea.vmem [#allocation8], 96
    %v935 = vld [vmem:[%s934] sm:$0xf]
    %v936 = vld [vmem:[%s934 + $0x8] sm:$0xf]
    %v937 = vld [vmem:[%s934 + $0x10] sm:$0xf]
    %v938 = vld [vmem:[%s934 + $0x18] sm:$0xf]
    %v939 = vld [vmem:[%s934 + $0x4] sm:$0xf]
    %v940 = vld [vmem:[%s934 + $0xc] sm:$0xf]
    %v941 = vld [vmem:[%s934 + $0x14] sm:$0xf]
    %v942 = vld [vmem:[%s934 + $0x1c] sm:$0xf]
    %v943 = vld [vmem:[%s934 + $0x20] sm:$0xf]
    %v944 = vld [vmem:[%s934 + $0x28] sm:$0xf]
    %v945 = vld [vmem:[%s934 + $0x30] sm:$0xf]
    %v946 = vld [vmem:[%s934 + $0x38] sm:$0xf]
    %v947 = vld [vmem:[%s934 + $0x40] sm:$0xf]
    %v948 = vld [vmem:[%s934 + $0x48] sm:$0xf]
    %v949 = vld [vmem:[%s934 + $0x50] sm:$0xf]
    %v950 = vld [vmem:[%s934 + $0x58] sm:$0xf]
    %s951 = scalar_lea.vmem [#allocation9], 8
    %v952 = vld [vmem:[%s951] sm:$0x1]
    %v953 = vld [vmem:[%s951 + $0x1] sm:$0x1]
    %v954 = vld [vmem:[%s951 + $0x2] sm:$0x1]
    %v955 = vld [vmem:[%s951 + $0x3] sm:$0x1]
    %v956 = vld [vmem:[%s951 + $0x4] sm:$0x1]
    %v957 = vld [vmem:[%s951 + $0x5] sm:$0x1]
    %v958 = vld [vmem:[%s951 + $0x6] sm:$0x1]
    %v959 = vld [vmem:[%s951 + $0x7] sm:$0x1]
    %v960 = vsel %vm100, %v932, 0.0
    %961 = vadd.xlane.f32.xlu0 %v960
    %v962 = vpop.xlane.xlu0 %961
    %v963 = vsel %vm100, %v933, 0.0
    %964 = vadd.xlane.f32.xlu0 %v963
    %v965 = vpop.xlane.xlu0 %964
    %v966 = vmul.f32 %v962, %v107
    %v967 = vmul.f32 %v965, %v107
    %v968 = vsub.f32 %v932, %v966
    %v969 = vsub.f32 %v933, %v967
    %v970 = vmul.f32 %v968, %v968
    %v971 = vmul.f32 %v969, %v969
    %v972 = vsel %vm100, %v970, 0.0
    %973 = vadd.xlane.f32.xlu0 %v972
    %v974 = vpop.xlane.xlu0 %973
    %v975 = vsel %vm100, %v971, 0.0
    %976 = vadd.xlane.f32.xlu0 %v975
    %v977 = vpop.xlane.xlu0 %976
    %v978 = vmul.f32 %v974, %v107
    %v979 = vmul.f32 %v977, %v107
    %v980 = vadd.f32 %v978, 1e-05
    %v981 = vadd.f32 %v979, 1e-05
    %v982 = vrsqrt.pop %v980
    %v983 = vrsqrt.pop %v981
    %v984 = vmul.f32 %v968, %v982
    %v985 = vmul.f32 %v969, %v983
    %v986 = vlaneseq
    %v987 = vshrl.u32 %v986, 7
    %v988 = vsub.s32 0, %v987
    %v989 = vrot.slane %v952, %v988
    %v990 = vmul.f32 %v984, %v989
    %v991 = vmul.f32 %v985, %v989
    %v992 = vlaneseq
    %v993 = vshrl.u32 %v992, 7
    %v994 = vsub.s32 0, %v993
    %v995 = vrot.slane %v953, %v994
    %v996 = vadd.f32 %v990, %v995
    %v997 = vadd.f32 %v991, %v995
    %v998 = vpack.c.bf16 %v997, %v996
    %v999 = vlaneseq
    %v1000 = vshrl.u32 %v999, 7
    %v1001 = vsub.s32 0, %v1000
    %v1002 = vrot.slane %v954, %v1001
    %v1007 = vunpack.c.l.b16 %v935
    %v1008 = vunpack.c.l.b16 %v936
    %v1009 = vunpack.c.l.b16 %v937
    %v1010 = vunpack.c.l.b16 %v938
    %v1011 = vpack.c.b16 %v1008, %v1007
    %v1012 = vpack.c.b16 %v1010, %v1009
    %v1016 = vsel %vm100, %v998, 0
    %1018 = vmatprep.subr.bf16.mxu0 0
    %1019 = vmatpush1.bf16.msra.mxu0 0
    %1020 = vmatprep.subr.bf16.mxu0 0
    %1021 = vmatpush1.bf16.msra.mxu0 0
    %1022 = vmatprep.subr.bf16.mxu0 0
    %1023 = vmatpush1.bf16.msra.mxu0 0
    %1024 = vmatprep.subr.bf16.mxu0 0
    %1025 = vmatpush1.bf16.msra.mxu0 0
    %1026 = vmatprep.subr.bf16.mxu0 0
    %1027 = vmatpush1.bf16.msra.mxu0 0
    %1028 = vmatprep.subr.bf16.mxu0 0
    %1029 = vmatpush1.bf16.msra.mxu0 0
    %1030 = vmatprep.subr.bf16.mxu0 0
    %1031 = vmatpush1.bf16.msra.mxu0 %v1012
    %1032 = vmatprep.subr.bf16.mxu0 0
    %1033 = vmatpush1.bf16.msra.mxu0 %v1011
    %1034 = vmatprep.subr.bf16.mxu0 0
    %1035 = vmatpush2.bf16.msra.mxu0 0
    %1036 = vmatprep.subr.bf16.mxu0 0
    %1037 = vmatpush2.bf16.msra.mxu0 0
    %1038 = vmatprep.subr.bf16.mxu0 0
    %1039 = vmatpush2.bf16.msra.mxu0 0
    %1040 = vmatprep.subr.bf16.mxu0 0
    %1041 = vmatpush2.bf16.msra.mxu0 0
    %1042 = vmatprep.subr.bf16.mxu0 0
    %1043 = vmatpush2.bf16.msra.mxu0 0
    %1044 = vmatprep.subr.bf16.mxu0 0
    %1045 = vmatpush2.bf16.msra.mxu0 0
    %1046 = vmatprep.subr.bf16.mxu0 0
    %1047 = vmatpush2.bf16.msra.mxu0 0
    %1048 = vmatprep.subr.bf16.mxu0 0
    %1049 = vmatpush2.bf16.msra.mxu0 0
    %1050 = vmatprep.mubr.bf16.mxu0 0
    %1051 = vmatmul.mubr.bf16.gmra.mxu0 %v1016
    %v1052 = vpop.f32.mrf.mxu0
    %v1053 = vadd.f32 %v1002, %v1052
    %v1054 = vpop.f32.mrf.mxu0
    %v1055 = vpop.f32.mrf.mxu0
    %v1056 = vadd.f32 %v1002, %v1055
    %v1057 = vpop.f32.mrf.mxu0
    %1058 = vdwg.mxu0
    %v1059 = vpack.c.bf16 %v1056, %v1053
    %v1060 = vld [vmem:[#allocation6] sm:$0x1]
    %v1062 = vlaneseq
    %v1063 = vshrl.u32 %v1062, 7
    %v1064 = vsub.s32 0, %v1063
    %v1065 = vrot.slane %v1060, %v1064
    %1068 = vrot.lane.b32.xlu0 %v1059, 96
    %v1069 = vpop.permute.xlu0 %1068
    %v1071 = vsel %vm212, %v1059, 0
    %v1074 = vsel %vm212, %v1069, 0
    %1076 = vmatprep.subr.bf16.mxu0 0
    %1077 = vmatpush1.bf16.xpose.msra.mxu0 0
    %1078 = vmatprep.subr.bf16.mxu0 0
    %1079 = vmatpush1.bf16.xpose.msra.mxu0 0
    %1080 = vmatprep.subr.bf16.mxu0 0
    %1081 = vmatpush1.bf16.xpose.msra.mxu0 0
    %1082 = vmatprep.subr.bf16.mxu0 0
    %1083 = vmatpush1.bf16.xpose.msra.mxu0 0
    %1084 = vmatprep.subr.bf16.mxu0 0
    %1085 = vmatpush1.bf16.xpose.msra.mxu0 0
    %1086 = vmatprep.subr.bf16.mxu0 0
    %1087 = vmatpush1.bf16.xpose.msra.mxu0 0
    %1088 = vmatprep.subr.bf16.mxu0 0
    %1089 = vmatpush1.bf16.xpose.msra.mxu0 0
    %1090 = vmatprep.subr.bf16.mxu0 0
    %1091 = vmatpush1.bf16.xpose.msra.mxu0 %v1074
    %1092 = vmatprep.subr.bf16.mxu0 0
    %1093 = vmatpush2.bf16.xpose.msra.mxu0 0
    %1094 = vmatprep.subr.bf16.mxu0 0
    %1095 = vmatpush2.bf16.xpose.msra.mxu0 0
    %1096 = vmatprep.subr.bf16.mxu0 0
    %1097 = vmatpush2.bf16.xpose.msra.mxu0 0
    %1098 = vmatprep.subr.bf16.mxu0 0
    %1099 = vmatpush2.bf16.xpose.msra.mxu0 0
    %1100 = vmatprep.subr.bf16.mxu0 0
    %1101 = vmatpush2.bf16.xpose.msra.mxu0 0
    %1102 = vmatprep.subr.bf16.mxu0 0
    %1103 = vmatpush2.bf16.xpose.msra.mxu0 0
    %1104 = vmatprep.subr.bf16.mxu0 0
    %1105 = vmatpush2.bf16.xpose.msra.mxu0 0
    %1106 = vmatprep.subr.bf16.mxu0 0
    %1107 = vmatpush2.bf16.xpose.msra.mxu0 0
    %1108 = vmatprep.mubr.bf16.mxu0 0
    %1109 = vmatmul.mubr.bf16.gmra.mxu0 %v1071
    %v1110 = vpop.f32.mrf.mxu0
    %v1111 = vadd.f32 %v1065, %v1110
    %v1112 = vpop.f32.mrf.mxu0
    %v1113 = vpop.f32.mrf.mxu0
    %v1114 = vpop.f32.mrf.mxu0
    %1115 = vdwg.mxu0
    %v1116 = vsel %vm259, %v1111, -inf
    %1117 = vmax.xlane.f32.xlu0 %v1116
    %v1118 = vpop.xlane.xlu0 %1117
    %v1119 = vsub.f32 %v1111, %v1118
    %v1120 = vmul.f32 %v1119, 1.442695
    %v1121 = vpow.pop %v1120
    %v1122 = vsel %vm259, %v1121, 0.0
    %1123 = vadd.xlane.f32.xlu0 %v1122
    %v1124 = vpop.xlane.xlu0 %1123
    %v1125 = vrcp.pop %v1124
    %v1126 = vmul.f32 %v1121, %v1125
    %v1127 = vpack.c.bf16 %v1126, %v1126
    %1128 = vrot.lane.b32.xlu0 %v1059, 64
    %v1129 = vpop.permute.xlu0 %1128
    %v1131 = vsel %vm259, %v1127, 0
    %v1134 = vsel %vm277, %v1129, 0
    %1136 = vmatprep.subr.bf16.mxu0 0
    %1137 = vmatpush1.bf16.msra.mxu0 0
    %1138 = vmatprep.subr.bf16.mxu0 0
    %1139 = vmatpush1.bf16.msra.mxu0 0
    %1140 = vmatprep.subr.bf16.mxu0 0
    %1141 = vmatpush1.bf16.msra.mxu0 0
    %1142 = vmatprep.subr.bf16.mxu0 0
    %1143 = vmatpush1.bf16.msra.mxu0 0
    %1144 = vmatprep.subr.bf16.mxu0 0
    %1145 = vmatpush1.bf16.msra.mxu0 0
    %1146 = vmatprep.subr.bf16.mxu0 0
    %1147 = vmatpush1.bf16.msra.mxu0 0
    %1148 = vmatprep.subr.bf16.mxu0 0
    %1149 = vmatpush1.bf16.msra.mxu0 0
    %1150 = vmatprep.subr.bf16.mxu0 0
    %1151 = vmatpush1.bf16.msra.mxu0 %v1134
    %1152 = vmatprep.subr.bf16.mxu0 0
    %1153 = vmatpush2.bf16.msra.mxu0 0
    %1154 = vmatprep.subr.bf16.mxu0 0
    %1155 = vmatpush2.bf16.msra.mxu0 0
    %1156 = vmatprep.subr.bf16.mxu0 0
    %1157 = vmatpush2.bf16.msra.mxu0 0
    %1158 = vmatprep.subr.bf16.mxu0 0
    %1159 = vmatpush2.bf16.msra.mxu0 0
    %1160 = vmatprep.subr.bf16.mxu0 0
    %1161 = vmatpush2.bf16.msra.mxu0 0
    %1162 = vmatprep.subr.bf16.mxu0 0
    %1163 = vmatpush2.bf16.msra.mxu0 0
    %1164 = vmatprep.subr.bf16.mxu0 0
    %1165 = vmatpush2.bf16.msra.mxu0 0
    %1166 = vmatprep.subr.bf16.mxu0 0
    %1167 = vmatpush2.bf16.msra.mxu0 0
    %1168 = vmatprep.mubr.bf16.mxu0 0
    %1169 = vmatmul.mubr.bf16.gmra.mxu0 %v1131
    %v1170 = vpop.f32.mrf.mxu0
    %v1171 = vadd.f32 0.0, %v1170
    %v1172 = vpop.f32.mrf.mxu0
    %v1173 = vpop.f32.mrf.mxu0
    %v1174 = vpop.f32.mrf.mxu0
    %1175 = vdwg.mxu0
    %v1176 = vpack.c.bf16 %v1171, %v1171
    %1177 = vst.msk [vmem:[#allocation2] sm:$0xf] %vm322, %v1176
    %1178 = vrot.lane.b32.xlu0 %v1059, 112
    %v1179 = vpop.permute.xlu0 %1178
    %1180 = vrot.lane.b32.xlu0 %v1059, 80
    %v1181 = vpop.permute.xlu0 %1180
    %v1183 = vsel %vm212, %v1179, 0
    %v1186 = vsel %vm212, %v1181, 0
    %1188 = vmatprep.subr.bf16.mxu0 0
    %1189 = vmatpush1.bf16.xpose.msra.mxu0 0
    %1190 = vmatprep.subr.bf16.mxu0 0
    %1191 = vmatpush1.bf16.xpose.msra.mxu0 0
    %1192 = vmatprep.subr.bf16.mxu0 0
    %1193 = vmatpush1.bf16.xpose.msra.mxu0 0
    %1194 = vmatprep.subr.bf16.mxu0 0
    %1195 = vmatpush1.bf16.xpose.msra.mxu0 0
    %1196 = vmatprep.subr.bf16.mxu0 0
    %1197 = vmatpush1.bf16.xpose.msra.mxu0 0
    %1198 = vmatprep.subr.bf16.mxu0 0
    %1199 = vmatpush1.bf16.xpose.msra.mxu0 0
    %1200 = vmatprep.subr.bf16.mxu0 0
    %1201 = vmatpush1.bf16.xpose.msra.mxu0 0
    %1202 = vmatprep.subr.bf16.mxu0 0
    %1203 = vmatpush1.bf16.xpose.msra.mxu0 %v1186
    %1204 = vmatprep.subr.bf16.mxu0 0
    %1205 = vmatpush2.bf16.xpose.msra.mxu0 0
    %1206 = vmatprep.subr.bf16.mxu0 0
    %1207 = vmatpush2.bf16.xpose.msra.mxu0 0
    %1208 = vmatprep.subr.bf16.mxu0 0
    %1209 = vmatpush2.bf16.xpose.msra.mxu0 0
    %1210 = vmatprep.subr.bf16.mxu0 0
    %1211 = vmatpush2.bf16.xpose.msra.mxu0 0
    %1212 = vmatprep.subr.bf16.mxu0 0
    %1213 = vmatpush2.bf16.xpose.msra.mxu0 0
    %1214 = vmatprep.subr.bf16.mxu0 0
    %1215 = vmatpush2.bf16.xpose.msra.mxu0 0
    %1216 = vmatprep.subr.bf16.mxu0 0
    %1217 = vmatpush2.bf16.xpose.msra.mxu0 0
    %1218 = vmatprep.subr.bf16.mxu0 0
    %1219 = vmatpush2.bf16.xpose.msra.mxu0 0
    %1220 = vmatprep.mubr.bf16.mxu0 0
    %1221 = vmatmul.mubr.bf16.gmra.mxu0 %v1183
    %v1222 = vpop.f32.mrf.mxu0
    %v1223 = vadd.f32 %v1065, %v1222
    %v1224 = vpop.f32.mrf.mxu0
    %v1225 = vpop.f32.mrf.mxu0
    %v1226 = vpop.f32.mrf.mxu0
    %1227 = vdwg.mxu0
    %v1228 = vsel %vm259, %v1223, -inf
    %1229 = vmax.xlane.f32.xlu0 %v1228
    %v1230 = vpop.xlane.xlu0 %1229
    %v1231 = vsub.f32 %v1223, %v1230
    %v1232 = vmul.f32 %v1231, 1.442695
    %v1233 = vpow.pop %v1232
    %v1234 = vsel %vm259, %v1233, 0.0
    %1235 = vadd.xlane.f32.xlu0 %v1234
    %v1236 = vpop.xlane.xlu0 %1235
    %v1237 = vrcp.pop %v1236
    %v1238 = vmul.f32 %v1233, %v1237
    %v1239 = vpack.c.bf16 %v1238, %v1238
    %1240 = vrot.lane.b32.xlu0 %v1059, 48
    %v1241 = vpop.permute.xlu0 %1240
    %v1243 = vsel %vm259, %v1239, 0
    %v1246 = vsel %vm277, %v1241, 0
    %1248 = vmatprep.subr.bf16.mxu0 0
    %1249 = vmatpush1.bf16.msra.mxu0 0
    %1250 = vmatprep.subr.bf16.mxu0 0
    %1251 = vmatpush1.bf16.msra.mxu0 0
    %1252 = vmatprep.subr.bf16.mxu0 0
    %1253 = vmatpush1.bf16.msra.mxu0 0
    %1254 = vmatprep.subr.bf16.mxu0 0
    %1255 = vmatpush1.bf16.msra.mxu0 0
    %1256 = vmatprep.subr.bf16.mxu0 0
    %1257 = vmatpush1.bf16.msra.mxu0 0
    %1258 = vmatprep.subr.bf16.mxu0 0
    %1259 = vmatpush1.bf16.msra.mxu0 0
    %1260 = vmatprep.subr.bf16.mxu0 0
    %1261 = vmatpush1.bf16.msra.mxu0 0
    %1262 = vmatprep.subr.bf16.mxu0 0
    %1263 = vmatpush1.bf16.msra.mxu0 %v1246
    %1264 = vmatprep.subr.bf16.mxu0 0
    %1265 = vmatpush2.bf16.msra.mxu0 0
    %1266 = vmatprep.subr.bf16.mxu0 0
    %1267 = vmatpush2.bf16.msra.mxu0 0
    %1268 = vmatprep.subr.bf16.mxu0 0
    %1269 = vmatpush2.bf16.msra.mxu0 0
    %1270 = vmatprep.subr.bf16.mxu0 0
    %1271 = vmatpush2.bf16.msra.mxu0 0
    %1272 = vmatprep.subr.bf16.mxu0 0
    %1273 = vmatpush2.bf16.msra.mxu0 0
    %1274 = vmatprep.subr.bf16.mxu0 0
    %1275 = vmatpush2.bf16.msra.mxu0 0
    %1276 = vmatprep.subr.bf16.mxu0 0
    %1277 = vmatpush2.bf16.msra.mxu0 0
    %1278 = vmatprep.subr.bf16.mxu0 0
    %1279 = vmatpush2.bf16.msra.mxu0 0
    %1280 = vmatprep.mubr.bf16.mxu0 0
    %1281 = vmatmul.mubr.bf16.gmra.mxu0 %v1243
    %v1282 = vpop.f32.mrf.mxu0
    %v1283 = vadd.f32 0.0, %v1282
    %v1284 = vpop.f32.mrf.mxu0
    %v1285 = vpop.f32.mrf.mxu0
    %v1286 = vpop.f32.mrf.mxu0
    %1287 = vdwg.mxu0
    %v1288 = vpack.c.bf16 %v1283, %v1283
    %v1290 = vunpack.c.l.b16 %v1288
    %v1291 = vpack.c.b16 %v1290, %v1290
    %1292 = vrot.lane.b32.xlu0 %v1291, 16
    %v1293 = vpop.permute.xlu0 %1292
    %1295 = vst.msk [vmem:[#allocation2] sm:$0xf] %vm441, %v1293
    %v1296 = vld [vmem:[%s443] sm:$0x1]
    %v1298 = vlaneseq
    %v1299 = vshrl.u32 %v1298, 7
    %v1300 = vsub.s32 0, %v1299
    %v1301 = vrot.slane %v1296, %v1300
    %v1303 = vrot.slane %v1059, 4
    %1304 = vrot.lane.b32.xlu0 %v1303, 96
    %v1305 = vpop.permute.xlu0 %1304
    %v1307 = vsel %vm212, %v1303, 0
    %v1310 = vsel %vm212, %v1305, 0
    %1312 = vmatprep.subr.bf16.mxu0 0
    %1313 = vmatpush1.bf16.xpose.msra.mxu0 0
    %1314 = vmatprep.subr.bf16.mxu0 0
    %1315 = vmatpush1.bf16.xpose.msra.mxu0 0
    %1316 = vmatprep.subr.bf16.mxu0 0
    %1317 = vmatpush1.bf16.xpose.msra.mxu0 0
    %1318 = vmatprep.subr.bf16.mxu0 0
    %1319 = vmatpush1.bf16.xpose.msra.mxu0 0
    %1320 = vmatprep.subr.bf16.mxu0 0
    %1321 = vmatpush1.bf16.xpose.msra.mxu0 0
    %1322 = vmatprep.subr.bf16.mxu0 0
    %1323 = vmatpush1.bf16.xpose.msra.mxu0 0
    %1324 = vmatprep.subr.bf16.mxu0 0
    %1325 = vmatpush1.bf16.xpose.msra.mxu0 0
    %1326 = vmatprep.subr.bf16.mxu0 0
    %1327 = vmatpush1.bf16.xpose.msra.mxu0 %v1310
    %1328 = vmatprep.subr.bf16.mxu0 0
    %1329 = vmatpush2.bf16.xpose.msra.mxu0 0
    %1330 = vmatprep.subr.bf16.mxu0 0
    %1331 = vmatpush2.bf16.xpose.msra.mxu0 0
    %1332 = vmatprep.subr.bf16.mxu0 0
    %1333 = vmatpush2.bf16.xpose.msra.mxu0 0
    %1334 = vmatprep.subr.bf16.mxu0 0
    %1335 = vmatpush2.bf16.xpose.msra.mxu0 0
    %1336 = vmatprep.subr.bf16.mxu0 0
    %1337 = vmatpush2.bf16.xpose.msra.mxu0 0
    %1338 = vmatprep.subr.bf16.mxu0 0
    %1339 = vmatpush2.bf16.xpose.msra.mxu0 0
    %1340 = vmatprep.subr.bf16.mxu0 0
    %1341 = vmatpush2.bf16.xpose.msra.mxu0 0
    %1342 = vmatprep.subr.bf16.mxu0 0
    %1343 = vmatpush2.bf16.xpose.msra.mxu0 0
    %1344 = vmatprep.mubr.bf16.mxu0 0
    %1345 = vmatmul.mubr.bf16.gmra.mxu0 %v1307
    %v1346 = vpop.f32.mrf.mxu0
    %v1347 = vadd.f32 %v1301, %v1346
    %v1348 = vpop.f32.mrf.mxu0
    %v1349 = vpop.f32.mrf.mxu0
    %v1350 = vpop.f32.mrf.mxu0
    %1351 = vdwg.mxu0
    %v1352 = vsel %vm259, %v1347, -inf
    %1353 = vmax.xlane.f32.xlu0 %v1352
    %v1354 = vpop.xlane.xlu0 %1353
    %v1355 = vsub.f32 %v1347, %v1354
    %v1356 = vmul.f32 %v1355, 1.442695
    %v1357 = vpow.pop %v1356
    %v1358 = vsel %vm259, %v1357, 0.0
    %1359 = vadd.xlane.f32.xlu0 %v1358
    %v1360 = vpop.xlane.xlu0 %1359
    %v1361 = vrcp.pop %v1360
    %v1362 = vmul.f32 %v1357, %v1361
    %v1363 = vpack.c.bf16 %v1362, %v1362
    %1364 = vrot.lane.b32.xlu0 %v1303, 64
    %v1365 = vpop.permute.xlu0 %1364
    %v1367 = vsel %vm259, %v1363, 0
    %v1370 = vsel %vm277, %v1365, 0
    %1372 = vmatprep.subr.bf16.mxu0 0
    %1373 = vmatpush1.bf16.msra.mxu0 0
    %1374 = vmatprep.subr.bf16.mxu0 0
    %1375 = vmatpush1.bf16.msra.mxu0 0
    %1376 = vmatprep.subr.bf16.mxu0 0
    %1377 = vmatpush1.bf16.msra.mxu0 0
    %1378 = vmatprep.subr.bf16.mxu0 0
    %1379 = vmatpush1.bf16.msra.mxu0 0
    %1380 = vmatprep.subr.bf16.mxu0 0
    %1381 = vmatpush1.bf16.msra.mxu0 0
    %1382 = vmatprep.subr.bf16.mxu0 0
    %1383 = vmatpush1.bf16.msra.mxu0 0
    %1384 = vmatprep.subr.bf16.mxu0 0
    %1385 = vmatpush1.bf16.msra.mxu0 0
    %1386 = vmatprep.subr.bf16.mxu0 0
    %1387 = vmatpush1.bf16.msra.mxu0 %v1370
    %1388 = vmatprep.subr.bf16.mxu0 0
    %1389 = vmatpush2.bf16.msra.mxu0 0
    %1390 = vmatprep.subr.bf16.mxu0 0
    %1391 = vmatpush2.bf16.msra.mxu0 0
    %1392 = vmatprep.subr.bf16.mxu0 0
    %1393 = vmatpush2.bf16.msra.mxu0 0
    %1394 = vmatprep.subr.bf16.mxu0 0
    %1395 = vmatpush2.bf16.msra.mxu0 0
    %1396 = vmatprep.subr.bf16.mxu0 0
    %1397 = vmatpush2.bf16.msra.mxu0 0
    %1398 = vmatprep.subr.bf16.mxu0 0
    %1399 = vmatpush2.bf16.msra.mxu0 0
    %1400 = vmatprep.subr.bf16.mxu0 0
    %1401 = vmatpush2.bf16.msra.mxu0 0
    %1402 = vmatprep.subr.bf16.mxu0 0
    %1403 = vmatpush2.bf16.msra.mxu0 0
    %1404 = vmatprep.mubr.bf16.mxu0 0
    %1405 = vmatmul.mubr.bf16.gmra.mxu0 %v1367
    %v1406 = vpop.f32.mrf.mxu0
    %v1407 = vadd.f32 0.0, %v1406
    %v1408 = vpop.f32.mrf.mxu0
    %v1409 = vpop.f32.mrf.mxu0
    %v1410 = vpop.f32.mrf.mxu0
    %1411 = vdwg.mxu0
    %v1412 = vpack.c.bf16 %v1407, %v1407
    %1413 = vst.msk [vmem:[#allocation2 + $0x4] sm:$0xf] %vm322, %v1412
    %1414 = vrot.lane.b32.xlu0 %v1303, 112
    %v1415 = vpop.permute.xlu0 %1414
    %1416 = vrot.lane.b32.xlu0 %v1303, 80
    %v1417 = vpop.permute.xlu0 %1416
    %v1419 = vsel %vm212, %v1415, 0
    %v1422 = vsel %vm212, %v1417, 0
    %1424 = vmatprep.subr.bf16.mxu0 0
    %1425 = vmatpush1.bf16.xpose.msra.mxu0 0
    %1426 = vmatprep.subr.bf16.mxu0 0
    %1427 = vmatpush1.bf16.xpose.msra.mxu0 0
    %1428 = vmatprep.subr.bf16.mxu0 0
    %1429 = vmatpush1.bf16.xpose.msra.mxu0 0
    %1430 = vmatprep.subr.bf16.mxu0 0
    %1431 = vmatpush1.bf16.xpose.msra.mxu0 0
    %1432 = vmatprep.subr.bf16.mxu0 0
    %1433 = vmatpush1.bf16.xpose.msra.mxu0 0
    %1434 = vmatprep.subr.bf16.mxu0 0
    %1435 = vmatpush1.bf16.xpose.msra.mxu0 0
    %1436 = vmatprep.subr.bf16.mxu0 0
    %1437 = vmatpush1.bf16.xpose.msra.mxu0 0
    %1438 = vmatprep.subr.bf16.mxu0 0
    %1439 = vmatpush1.bf16.xpose.msra.mxu0 %v1422
    %1440 = vmatprep.subr.bf16.mxu0 0
    %1441 = vmatpush2.bf16.xpose.msra.mxu0 0
    %1442 = vmatprep.subr.bf16.mxu0 0
    %1443 = vmatpush2.bf16.xpose.msra.mxu0 0
    %1444 = vmatprep.subr.bf16.mxu0 0
    %1445 = vmatpush2.bf16.xpose.msra.mxu0 0
    %1446 = vmatprep.subr.bf16.mxu0 0
    %1447 = vmatpush2.bf16.xpose.msra.mxu0 0
    %1448 = vmatprep.subr.bf16.mxu0 0
    %1449 = vmatpush2.bf16.xpose.msra.mxu0 0
    %1450 = vmatprep.subr.bf16.mxu0 0
    %1451 = vmatpush2.bf16.xpose.msra.mxu0 0
    %1452 = vmatprep.subr.bf16.mxu0 0
    %1453 = vmatpush2.bf16.xpose.msra.mxu0 0
    %1454 = vmatprep.subr.bf16.mxu0 0
    %1455 = vmatpush2.bf16.xpose.msra.mxu0 0
    %1456 = vmatprep.mubr.bf16.mxu0 0
    %1457 = vmatmul.mubr.bf16.gmra.mxu0 %v1419
    %v1458 = vpop.f32.mrf.mxu0
    %v1459 = vadd.f32 %v1301, %v1458
    %v1460 = vpop.f32.mrf.mxu0
    %v1461 = vpop.f32.mrf.mxu0
    %v1462 = vpop.f32.mrf.mxu0
    %1463 = vdwg.mxu0
    %v1464 = vsel %vm259, %v1459, -inf
    %1465 = vmax.xlane.f32.xlu0 %v1464
    %v1466 = vpop.xlane.xlu0 %1465
    %v1467 = vsub.f32 %v1459, %v1466
    %v1468 = vmul.f32 %v1467, 1.442695
    %v1469 = vpow.pop %v1468
    %v1470 = vsel %vm259, %v1469, 0.0
    %1471 = vadd.xlane.f32.xlu0 %v1470
    %v1472 = vpop.xlane.xlu0 %1471
    %v1473 = vrcp.pop %v1472
    %v1474 = vmul.f32 %v1469, %v1473
    %v1475 = vpack.c.bf16 %v1474, %v1474
    %1476 = vrot.lane.b32.xlu0 %v1303, 48
    %v1477 = vpop.permute.xlu0 %1476
    %v1479 = vsel %vm259, %v1475, 0
    %v1482 = vsel %vm277, %v1477, 0
    %1484 = vmatprep.subr.bf16.mxu0 0
    %1485 = vmatpush1.bf16.msra.mxu0 0
    %1486 = vmatprep.subr.bf16.mxu0 0
    %1487 = vmatpush1.bf16.msra.mxu0 0
    %1488 = vmatprep.subr.bf16.mxu0 0
    %1489 = vmatpush1.bf16.msra.mxu0 0
    %1490 = vmatprep.subr.bf16.mxu0 0
    %1491 = vmatpush1.bf16.msra.mxu0 0
    %1492 = vmatprep.subr.bf16.mxu0 0
    %1493 = vmatpush1.bf16.msra.mxu0 0
    %1494 = vmatprep.subr.bf16.mxu0 0
    %1495 = vmatpush1.bf16.msra.mxu0 0
    %1496 = vmatprep.subr.bf16.mxu0 0
    %1497 = vmatpush1.bf16.msra.mxu0 0
    %1498 = vmatprep.subr.bf16.mxu0 0
    %1499 = vmatpush1.bf16.msra.mxu0 %v1482
    %1500 = vmatprep.subr.bf16.mxu0 0
    %1501 = vmatpush2.bf16.msra.mxu0 0
    %1502 = vmatprep.subr.bf16.mxu0 0
    %1503 = vmatpush2.bf16.msra.mxu0 0
    %1504 = vmatprep.subr.bf16.mxu0 0
    %1505 = vmatpush2.bf16.msra.mxu0 0
    %1506 = vmatprep.subr.bf16.mxu0 0
    %1507 = vmatpush2.bf16.msra.mxu0 0
    %1508 = vmatprep.subr.bf16.mxu0 0
    %1509 = vmatpush2.bf16.msra.mxu0 0
    %1510 = vmatprep.subr.bf16.mxu0 0
    %1511 = vmatpush2.bf16.msra.mxu0 0
    %1512 = vmatprep.subr.bf16.mxu0 0
    %1513 = vmatpush2.bf16.msra.mxu0 0
    %1514 = vmatprep.subr.bf16.mxu0 0
    %1515 = vmatpush2.bf16.msra.mxu0 0
    %1516 = vmatprep.mubr.bf16.mxu0 0
    %1517 = vmatmul.mubr.bf16.gmra.mxu0 %v1479
    %v1518 = vpop.f32.mrf.mxu0
    %v1519 = vadd.f32 0.0, %v1518
    %v1520 = vpop.f32.mrf.mxu0
    %v1521 = vpop.f32.mrf.mxu0
    %v1522 = vpop.f32.mrf.mxu0
    %1523 = vdwg.mxu0
    %v1524 = vpack.c.bf16 %v1519, %v1519
    %v1526 = vunpack.c.l.b16 %v1524
    %v1527 = vpack.c.b16 %v1526, %v1526
    %1528 = vrot.lane.b32.xlu0 %v1527, 16
    %v1529 = vpop.permute.xlu0 %1528
    %1531 = vst.msk [vmem:[#allocation2 + $0x4] sm:$0xf] %vm441, %v1529
    %v1532 = vld [vmem:[#allocation2] sm:$0xf]
    %v1533 = vld [vmem:[#allocation2 + $0x4] sm:$0xf]
    %v1534 = vlaneseq
    %v1535 = vshrl.u32 %v1534, 7
    %v1536 = vsub.s32 0, %v1535
    %v1537 = vrot.slane %v955, %v1536
    %v1540 = vunpack.c.l.b16 %v1532
    %v1541 = vunpack.c.l.b16 %v1533
    %v1542 = vpack.c.b16 %v1541, %v1540
    %1543 = vrot.lane.b32.xlu0 %v1011, 32
    %v1544 = vpop.permute.xlu0 %1543
    %1545 = vrot.lane.b32.xlu0 %v1012, 32
    %v1546 = vpop.permute.xlu0 %1545
    %v1550 = vsel %vm100, %v1542, 0
    %1552 = vmatprep.subr.bf16.mxu0 0
    %1553 = vmatpush1.bf16.msra.mxu0 0
    %1554 = vmatprep.subr.bf16.mxu0 0
    %1555 = vmatpush1.bf16.msra.mxu0 0
    %1556 = vmatprep.subr.bf16.mxu0 0
    %1557 = vmatpush1.bf16.msra.mxu0 0
    %1558 = vmatprep.subr.bf16.mxu0 0
    %1559 = vmatpush1.bf16.msra.mxu0 0
    %1560 = vmatprep.subr.bf16.mxu0 0
    %1561 = vmatpush1.bf16.msra.mxu0 0
    %1562 = vmatprep.subr.bf16.mxu0 0
    %1563 = vmatpush1.bf16.msra.mxu0 0
    %1564 = vmatprep.subr.bf16.mxu0 0
    %1565 = vmatpush1.bf16.msra.mxu0 %v1546
    %1566 = vmatprep.subr.bf16.mxu0 0
    %1567 = vmatpush1.bf16.msra.mxu0 %v1544
    %1568 = vmatprep.subr.bf16.mxu0 0
    %1569 = vmatpush2.bf16.msra.mxu0 0
    %1570 = vmatprep.subr.bf16.mxu0 0
    %1571 = vmatpush2.bf16.msra.mxu0 0
    %1572 = vmatprep.subr.bf16.mxu0 0
    %1573 = vmatpush2.bf16.msra.mxu0 0
    %1574 = vmatprep.subr.bf16.mxu0 0
    %1575 = vmatpush2.bf16.msra.mxu0 0
    %1576 = vmatprep.subr.bf16.mxu0 0
    %1577 = vmatpush2.bf16.msra.mxu0 0
    %1578 = vmatprep.subr.bf16.mxu0 0
    %1579 = vmatpush2.bf16.msra.mxu0 0
    %1580 = vmatprep.subr.bf16.mxu0 0
    %1581 = vmatpush2.bf16.msra.mxu0 0
    %1582 = vmatprep.subr.bf16.mxu0 0
    %1583 = vmatpush2.bf16.msra.mxu0 0
    %1584 = vmatprep.mubr.bf16.mxu0 0
    %1585 = vmatmul.mubr.bf16.gmra.mxu0 %v1550
    %v1586 = vpop.f32.mrf.mxu0
    %v1587 = vadd.f32 %v1537, %v1586
    %v1588 = vpop.f32.mrf.mxu0
    %v1589 = vpop.f32.mrf.mxu0
    %v1590 = vadd.f32 %v1537, %v1589
    %v1591 = vpop.f32.mrf.mxu0
    %1592 = vdwg.mxu0
    %v1593 = vadd.f32 %v932, %v1587
    %v1594 = vadd.f32 %v933, %v1590
    %v1595 = vsel %vm100, %v1593, 0.0
    %1596 = vadd.xlane.f32.xlu0 %v1595
    %v1597 = vpop.xlane.xlu0 %1596
    %v1598 = vsel %vm100, %v1594, 0.0
    %1599 = vadd.xlane.f32.xlu0 %v1598
    %v1600 = vpop.xlane.xlu0 %1599
    %v1601 = vmul.f32 %v1597, %v107
    %v1602 = vmul.f32 %v1600, %v107
    %v1603 = vsub.f32 %v1593, %v1601
    %v1604 = vsub.f32 %v1594, %v1602
    %v1605 = vmul.f32 %v1603, %v1603
    %v1606 = vmul.f32 %v1604, %v1604
    %v1607 = vsel %vm100, %v1605, 0.0
    %1608 = vadd.xlane.f32.xlu0 %v1607
    %v1609 = vpop.xlane.xlu0 %1608
    %v1610 = vsel %vm100, %v1606, 0.0
    %1611 = vadd.xlane.f32.xlu0 %v1610
    %v1612 = vpop.xlane.xlu0 %1611
    %v1613 = vmul.f32 %v1609, %v107
    %v1614 = vmul.f32 %v1612, %v107
    %v1615 = vadd.f32 %v1613, 1e-05
    %v1616 = vadd.f32 %v1614, 1e-05
    %v1617 = vrsqrt.pop %v1615
    %v1618 = vrsqrt.pop %v1616
    %v1619 = vmul.f32 %v1603, %v1617
    %v1620 = vmul.f32 %v1604, %v1618
    %v1621 = vlaneseq
    %v1622 = vshrl.u32 %v1621, 7
    %v1623 = vsub.s32 0, %v1622
    %v1624 = vrot.slane %v956, %v1623
    %v1625 = vmul.f32 %v1619, %v1624
    %v1626 = vmul.f32 %v1620, %v1624
    %v1627 = vlaneseq
    %v1628 = vshrl.u32 %v1627, 7
    %v1629 = vsub.s32 0, %v1628
    %v1630 = vrot.slane %v957, %v1629
    %v1631 = vadd.f32 %v1625, %v1630
    %v1632 = vadd.f32 %v1626, %v1630
    %v1633 = vpack.c.bf16 %v1632, %v1631
    %v1634 = vlaneseq
    %v1635 = vshrl.u32 %v1634, 7
    %v1636 = vsub.s32 0, %v1635
    %v1637 = vrot.slane %v958, %v1636
    %v1642 = vunpack.c.l.b16 %v939
    %v1643 = vunpack.c.l.b16 %v940
    %v1644 = vunpack.c.l.b16 %v941
    %v1645 = vunpack.c.l.b16 %v942
    %v1646 = vpack.c.b16 %v1643, %v1642
    %v1647 = vpack.c.b16 %v1645, %v1644
    %v1651 = vsel %vm100, %v1633, 0
    %1653 = vmatprep.subr.bf16.mxu0 0
    %1654 = vmatpush1.bf16.msra.mxu0 0
    %1655 = vmatprep.subr.bf16.mxu0 0
    %1656 = vmatpush1.bf16.msra.mxu0 0
    %1657 = vmatprep.subr.bf16.mxu0 0
    %1658 = vmatpush1.bf16.msra.mxu0 0
    %1659 = vmatprep.subr.bf16.mxu0 0
    %1660 = vmatpush1.bf16.msra.mxu0 0
    %1661 = vmatprep.subr.bf16.mxu0 0
    %1662 = vmatpush1.bf16.msra.mxu0 0
    %1663 = vmatprep.subr.bf16.mxu0 0
    %1664 = vmatpush1.bf16.msra.mxu0 0
    %1665 = vmatprep.subr.bf16.mxu0 0
    %1666 = vmatpush1.bf16.msra.mxu0 %v1647
    %1667 = vmatprep.subr.bf16.mxu0 0
    %1668 = vmatpush1.bf16.msra.mxu0 %v1646
    %1669 = vmatprep.subr.bf16.mxu0 0
    %1670 = vmatpush2.bf16.msra.mxu0 0
    %1671 = vmatprep.subr.bf16.mxu0 0
    %1672 = vmatpush2.bf16.msra.mxu0 0
    %1673 = vmatprep.subr.bf16.mxu0 0
    %1674 = vmatpush2.bf16.msra.mxu0 0
    %1675 = vmatprep.subr.bf16.mxu0 0
    %1676 = vmatpush2.bf16.msra.mxu0 0
    %1677 = vmatprep.subr.bf16.mxu0 0
    %1678 = vmatpush2.bf16.msra.mxu0 0
    %1679 = vmatprep.subr.bf16.mxu0 0
    %1680 = vmatpush2.bf16.msra.mxu0 0
    %1681 = vmatprep.subr.bf16.mxu0 0
    %1682 = vmatpush2.bf16.msra.mxu0 0
    %1683 = vmatprep.subr.bf16.mxu0 0
    %1684 = vmatpush2.bf16.msra.mxu0 0
    %1685 = vmatprep.mubr.bf16.mxu0 0
    %1686 = vmatmul.mubr.bf16.gmra.mxu0 %v1651
    %v1687 = vpop.f32.mrf.mxu0
    %v1688 = vadd.f32 %v1637, %v1687
    %v1689 = vpop.f32.mrf.mxu0
    %v1690 = vpop.f32.mrf.mxu0
    %v1691 = vadd.f32 %v1637, %v1690
    %v1692 = vpop.f32.mrf.mxu0
    %1693 = vdwg.mxu0
    %v1694 = vmul.f32 %v1688, 1.702
    %v1695 = vmul.f32 %v1691, 1.702
    %v1696 = vxor.u32 %v1694, 2147483648
    %v1697 = vxor.u32 %v1695, 2147483648
    %v1698 = vmul.f32 %v1696, 1.442695
    %v1699 = vpow.pop %v1698
    %v1700 = vmul.f32 %v1697, 1.442695
    %v1701 = vpow.pop %v1700
    %v1702 = vadd.f32 %v1699, 1.0
    %v1703 = vadd.f32 %v1701, 1.0
    %v1704 = vrcp.pop %v1702
    %v1705 = vmul.f32 1.0, %v1704
    %v1706 = vrcp.pop %v1703
    %v1707 = vmul.f32 1.0, %v1706
    %v1708 = vmul.f32 %v1688, %v1705
    %v1709 = vmul.f32 %v1691, %v1707
    %v1710 = vpack.c.bf16 %v1709, %v1708
    %v1711 = vlaneseq
    %v1712 = vshrl.u32 %v1711, 7
    %v1713 = vsub.s32 0, %v1712
    %v1714 = vrot.slane %v959, %v1713
    %v1723 = vunpack.c.l.b16 %v943
    %v1724 = vunpack.c.l.b16 %v944
    %v1725 = vunpack.c.l.b16 %v945
    %v1726 = vunpack.c.l.b16 %v946
    %v1727 = vunpack.c.l.b16 %v947
    %v1728 = vunpack.c.l.b16 %v948
    %v1729 = vunpack.c.l.b16 %v949
    %v1730 = vunpack.c.l.b16 %v950
    %v1731 = vpack.c.b16 %v1724, %v1723
    %v1732 = vpack.c.b16 %v1726, %v1725
    %v1733 = vpack.c.b16 %v1728, %v1727
    %v1734 = vpack.c.b16 %v1730, %v1729
    %v1740 = vsel %vm887, %v1710, 0
    %1742 = vmatprep.subr.bf16.mxu0 0
    %1743 = vmatpush1.bf16.msra.mxu0 0
    %1744 = vmatprep.subr.bf16.mxu0 0
    %1745 = vmatpush1.bf16.msra.mxu0 0
    %1746 = vmatprep.subr.bf16.mxu0 0
    %1747 = vmatpush1.bf16.msra.mxu0 0
    %1748 = vmatprep.subr.bf16.mxu0 0
    %1749 = vmatpush1.bf16.msra.mxu0 0
    %1750 = vmatprep.subr.bf16.mxu0 0
    %1751 = vmatpush1.bf16.msra.mxu0 %v1734
    %1752 = vmatprep.subr.bf16.mxu0 0
    %1753 = vmatpush1.bf16.msra.mxu0 %v1733
    %1754 = vmatprep.subr.bf16.mxu0 0
    %1755 = vmatpush1.bf16.msra.mxu0 %v1732
    %1756 = vmatprep.subr.bf16.mxu0 0
    %1757 = vmatpush1.bf16.msra.mxu0 %v1731
    %1758 = vmatprep.subr.bf16.mxu0 0
    %1759 = vmatpush2.bf16.msra.mxu0 0
    %1760 = vmatprep.subr.bf16.mxu0 0
    %1761 = vmatpush2.bf16.msra.mxu0 0
    %1762 = vmatprep.subr.bf16.mxu0 0
    %1763 = vmatpush2.bf16.msra.mxu0 0
    %1764 = vmatprep.subr.bf16.mxu0 0
    %1765 = vmatpush2.bf16.msra.mxu0 0
    %1766 = vmatprep.subr.bf16.mxu0 0
    %1767 = vmatpush2.bf16.msra.mxu0 0
    %1768 = vmatprep.subr.bf16.mxu0 0
    %1769 = vmatpush2.bf16.msra.mxu0 0
    %1770 = vmatprep.subr.bf16.mxu0 0
    %1771 = vmatpush2.bf16.msra.mxu0 0
    %1772 = vmatprep.subr.bf16.mxu0 0
    %1773 = vmatpush2.bf16.msra.mxu0 0
    %1774 = vmatprep.mubr.bf16.mxu0 0
    %1775 = vmatmul.mubr.bf16.gmra.mxu0 %v1740
    %v1776 = vpop.f32.mrf.mxu0
    %v1777 = vadd.f32 %v1714, %v1776
    %v1778 = vpop.f32.mrf.mxu0
    %v1779 = vpop.f32.mrf.mxu0
    %v1780 = vadd.f32 %v1714, %v1779
    %v1781 = vpop.f32.mrf.mxu0
    %1782 = vdwg.mxu0
    %v1783 = vadd.f32 %v1593, %v1777
    %v1784 = vadd.f32 %v1594, %v1780
    %1785 = vst.msk [vmem:[#allocation11] sm:$0xff] %vm100, %v1783
    %1786 = vst.msk [vmem:[#allocation11 + $0x8] sm:$0xff] %vm100, %v1784
    // Predicated region
    $region34: #{tpu_custom_call.1} parent=1 // pred_check
      _
    $region35: #{tpu_custom_call.1} parent=1 // pred_check_branch
      %1788 = sbr.rel (0) target = $region37
    $region36: #{tpu_custom_call.1} parent=1 // pred_region
      %s1790 = ssub.s32 256, 256
      %1791 = vsyncadd [#allocation5], %s1790
      %s1792 = sshll.u32 [#allocation11], 4
      %s1793 = int_to_ptr.vmem [resolvable:$true] %s1792
      %1798 = dma.vmem_to_hbm [thread:$0]  %s1793, 256, %s4, [#allocation5], 128, 128, 8
    $region37: #{tpu_custom_call.1} parent=1 // pred_fallthru
      _
    // Predicated region
    $region38: #{tpu_custom_call.1} parent=1 // pred_check
      _
    $region39: #{tpu_custom_call.1} parent=1 // pred_check_branch
      %1800 = sbr.rel (0) target = $region41
    $region40: #{tpu_custom_call.1} parent=1 // pred_region
      %1801 = dma.done [#allocation5], 256
    $region41: #{tpu_custom_call.1} parent=1 // pred_fallthru
      _
    %1802 = vsyncpa [#allocation4], 1
    %1803 = vsyncpa [#allocation7], 1
    %1804 = vsyncpa [#allocation10], 1
    %1805 = vsyncpa [#allocation5], 1

</llo_original>
